<compile_context>
chip_gen: v7x
topology: tpu7x:2x2x1
jax: 0.10.0
libtpu: 0.0.40
codegen_flags: <defaults>
</compile_context>

<pallas_src>
import functools

import jax
import jax.numpy as jnp
from jax.experimental import pallas as pl
from jax.experimental.pallas import tpu as pltpu

LANE = 128        # feature padding (lane width)
NODE_ALIGN = 128  # node-dim padding (lane-dense bf16 adjacency)
EPS = 1e-5


# ------------------------------ helpers ------------------------------------ #
def _vmem_limit_bytes():
    """Generation-aware scoped-VMEM limit: ~80% of physical, capped at 104 MiB."""
    try:
        cap = pltpu.get_tpu_info().vmem_capacity_bytes
        return int(min(cap * 0.8, 104 * 1024 * 1024))
    except Exception:
        return 48 * 1024 * 1024   # safe on v5e/v6e (128 MiB) and v7x (64 MiB)


def _const_spec(shape):
    """Full-array block with a constant index map; single-buffered (the index
    never changes across the layer grid, so double-buffering is pure waste)."""
    idx = lambda l: (0,) * len(shape)
    try:
        return pl.BlockSpec(shape, idx, pipeline_mode=pl.Buffered(1))
    except Exception:   # older jax without pipeline_mode / Buffered(1)
        return pl.BlockSpec(shape, idx)


# --------------------- fused GNN block + head kernel ----------------------- #
def fused_gnn_kernel(a_ref, x0_ref, w_ref, s_ref, w1_ref, b1_ref, w2_ref, b2_ref,
                     emb_ref, logits_ref, x_scr, *, n_true):
    """One grid step == one GNN layer: X <- PReLU(BN(A @ (X @ W) + b)).
    On the last layer, also runs the classification head on the result."""
    layer = pl.program_id(0)
    last = pl.num_programs(0) - 1

    # Layer 0: load the (padded, bf16) input features into the resident scratch.
    @pl.when(layer == 0)
    def _():
        x_scr[...] = x0_ref[...]

    sv = s_ref[...]                                   # (4, p) f32
    bias, gamma, beta, alpha = sv[0:1], sv[1:2], sv[2:3], sv[3:4]

    # GCNConv: transform then aggregate, both on the MXU (bf16 in, f32 acc).
    xw = jnp.dot(x_scr[...], w_ref[...], preferred_element_type=jnp.float32)
    h = jnp.dot(a_ref[...], xw.astype(jnp.bfloat16),
                preferred_element_type=jnp.float32) + bias

    # BatchNorm1d over the node axis (training-mode batch stats, biased var),
    # folded into a single scale/shift FMA.  Padded rows are masked out of the
    # statistics and the divisor is the true node count.
    n_pad = h.shape[0]
    if n_pad != n_true:
        rmask = jax.lax.broadcasted_iota(jnp.int32, (n_pad, 1), 0) < n_true
        inv_n = 1.0 / float(n_true)
        mean = jnp.sum(jnp.where(rmask, h, 0.0), axis=0, keepdims=True) * inv_n
        d = h - mean
        var = jnp.sum(jnp.where(rmask, d * d, 0.0), axis=0, keepdims=True) * inv_n
    else:
        mean = jnp.mean(h, axis=0, keepdims=True)
        var = jnp.mean((h - mean) ** 2, axis=0, keepdims=True)
    scale = gamma * jax.lax.rsqrt(var + EPS)
    shift = beta - mean * scale
    y = h * scale + shift
    y = jnp.where(y > 0, y, alpha * y)                # PReLU (shared alpha per layer)

    # Not-last layer: keep the running features resident in bf16 VMEM scratch.
    @pl.when(layer < last)
    def _():
        x_scr[...] = y.astype(jnp.bfloat16)

    # Last layer: emit embeddings + fused classification head (Linear-ReLU-Linear).
    @pl.when(layer == last)
    def _():
        emb_ref[...] = y
        yb = y.astype(jnp.bfloat16)
        h1 = jnp.dot(yb, w1_ref[...], preferred_element_type=jnp.float32) + b1_ref[...]
        h1 = jnp.maximum(h1, 0.0)
        logits_ref[...] = jnp.dot(h1.astype(jnp.bfloat16), w2_ref[...],
                                  preferred_element_type=jnp.float32) + b2_ref[...]


def fused_forward_pallas(a_bf16, x0_bf16, w, s, w1, b1, w2, b2, *, n_true):
    n_pad, p = x0_bf16.shape
    num_layers = w.shape[0]
    c_pad = w2.shape[1]
    kernel = functools.partial(fused_gnn_kernel, n_true=n_true)
    return pl.pallas_call(
        kernel,
        grid=(num_layers,),
        out_shape=(jax.ShapeDtypeStruct((n_pad, p), jnp.float32),      # embeddings
                   jax.ShapeDtypeStruct((n_pad, c_pad), jnp.float32)), # logits
        in_specs=[
            _const_spec((n_pad, n_pad)),                       # A_norm (bf16), fetched once
            _const_spec((n_pad, p)),                           # X0 (bf16), fetched once
            pl.BlockSpec((None, p, p), lambda l: (l, 0, 0)),   # W[l] (bf16)
            pl.BlockSpec((None, 4, p), lambda l: (l, 0, 0)),   # [bias;gamma;beta;alpha][l]
            pl.BlockSpec((p, p), lambda l: (0, 0)),            # head W1 (bf16)
            pl.BlockSpec((1, p), lambda l: (0, 0)),            # head b1
            pl.BlockSpec((p, c_pad), lambda l: (0, 0)),        # head W2 (bf16)
            pl.BlockSpec((1, c_pad), lambda l: (0, 0)),        # head b2
        ],
        out_specs=(pl.BlockSpec((n_pad, p), lambda l: (0, 0)),
                   pl.BlockSpec((n_pad, c_pad), lambda l: (0, 0))),
        scratch_shapes=[pltpu.VMEM((n_pad, p), jnp.bfloat16)],         # resident X (bf16)
        compiler_params=pltpu.CompilerParams(
            dimension_semantics=("arbitrary",),                # layers are sequential
            vmem_limit_bytes=_vmem_limit_bytes(),
        ),
    )(a_bf16, x0_bf16, w, s, w1, b1, w2, b2)


# ------------------------------ JAX glue ----------------------------------- #
def build_gcn_adj(edge_index, num_nodes):
    """Dense D^-1/2 (A + I) D^-1/2 from a [2, E] edge_index (source, target)."""
    src = edge_index[0]
    dst = edge_index[1]
    loops = jnp.arange(num_nodes, dtype=edge_index.dtype)
    src = jnp.concatenate([src, loops])
    dst = jnp.concatenate([dst, loops])
    adj = jnp.zeros((num_nodes, num_nodes), jnp.float32).at[dst, src].add(1.0)
    deg = adj.sum(axis=1)
    dinv = jnp.where(deg > 0, 1.0 / jnp.sqrt(deg), 0.0)
    return dinv[:, None] * adj * dinv[None, :]


def pack_gnn_params(params, p_pad):
    """Stack per-layer params, zero-padded to p_pad lanes.
    W pre-cast to bf16; scale/shift params packed into one [L, 4, p] array."""
    num_layers = len(params)
    w = jnp.zeros((num_layers, p_pad, p_pad), jnp.bfloat16)
    s = jnp.zeros((num_layers, 4, p_pad), jnp.float32)   # rows: bias, gamma, beta, alpha
    for i, prm in enumerate(params):
        fi, fo = prm["w"].shape
        w = w.at[i, :fi, :fo].set(prm["w"].astype(jnp.bfloat16))
        s = s.at[i, 0, :fo].set(prm["b"][0])
        s = s.at[i, 1, :fo].set(prm["gamma"][0])      # padded gamma=0 -> padded lanes stay 0
        s = s.at[i, 2, :fo].set(prm["beta"][0])
        s = s.at[i, 3, :].set(prm["alpha"][0, 0])     # shared scalar broadcast across lanes
    return w, s


def pack_head_params(head, p_pad, c_pad):
    d = head["w1"].shape[0]
    c = head["w2"].shape[1]
    w1 = jnp.zeros((p_pad, p_pad), jnp.bfloat16).at[:d, :d].set(head["w1"].astype(jnp.bfloat16))
    b1 = jnp.zeros((1, p_pad), jnp.float32).at[0, :d].set(head["b1"])
    w2 = jnp.zeros((p_pad, c_pad), jnp.bfloat16).at[:d, :c].set(head["w2"].astype(jnp.bfloat16))
    b2 = jnp.zeros((1, c_pad), jnp.float32).at[0, :c].set(head["b2"])
    return w1, b1, w2, b2


def contrastive_gnn_forward(gnn_params, head_params, x, edge_index):
    n, f_in = x.shape
    out_dim = gnn_params[-1]["w"].shape[1]
    num_classes = head_params["w2"].shape[1]
    n_pad = ((n + NODE_ALIGN - 1) // NODE_ALIGN) * NODE_ALIGN
    c_pad = LANE

    a = build_gcn_adj(edge_index, n)
    a_pad = jnp.zeros((n_pad, n_pad), jnp.float32).at[:n, :n].set(a).astype(jnp.bfloat16)
    x_pad = jnp.zeros((n_pad, LANE), jnp.float32).at[:n, :f_in].set(x).astype(jnp.bfloat16)

    w, s = pack_gnn_params(gnn_params, LANE)
    w1, b1, w2, b2 = pack_head_params(head_params, LANE, c_pad)

    emb_pad, logits_pad = fused_forward_pallas(a_pad, x_pad, w, s, w1, b1, w2, b2, n_true=n)

    emb = emb_pad[:n, :out_dim]
    logits = logits_pad[:n, :num_classes]
    out = jnp.argmax(logits, axis=1)
    return emb, logits, out


def init_params(key, input_dim, hidden_dim, output_dim, num_layers, num_classes):
    gnn = []
    cur_in, cur_out = input_dim, hidden_dim
    for layer_index in range(num_layers):
        if layer_index == num_layers - 1:
            cur_out = output_dim
        key, wk = jax.random.split(key)
        scale = jnp.sqrt(2.0 / (cur_in + cur_out))  # glorot-style
        gnn.append(dict(
            w=jax.random.normal(wk, (cur_in, cur_out), jnp.float32) * scale,
            b=jnp.zeros((1, cur_out), jnp.float32),
            gamma=jnp.ones((1, cur_out), jnp.float32),
            beta=jnp.zeros((1, cur_out), jnp.float32),
            alpha=jnp.full((1, 1), 0.25, jnp.float32),
        ))
        cur_in = cur_out
    key, k1, k2, k3, k4 = jax.random.split(key, 5)
    head = dict(
        w1=jax.random.normal(k1, (output_dim, output_dim), jnp.float32) * jnp.sqrt(2.0 / output_dim),
        b1=jax.random.normal(k2, (output_dim,), jnp.float32) * 0.01,
        w2=jax.random.normal(k3, (output_dim, num_classes), jnp.float32) * jnp.sqrt(2.0 / output_dim),
        b2=jax.random.normal(k4, (num_classes,), jnp.float32) * 0.01,
    )
    return gnn, head


def reference_forward(gnn_params, head_params, x, edge_index):
    """Pure-JAX reference mirroring the kernel's bf16 matmul inputs / f32 acc."""
    a = build_gcn_adj(edge_index, x.shape[0]).astype(jnp.bfloat16)
    h = x
    for p in gnn_params:
        xw = jnp.dot(h.astype(jnp.bfloat16), p["w"].astype(jnp.bfloat16),
                     preferred_element_type=jnp.float32)
        z = jnp.dot(a, xw.astype(jnp.bfloat16),
                    preferred_element_type=jnp.float32) + p["b"]
        mean = z.mean(axis=0, keepdims=True)
        var = ((z - mean) ** 2).mean(axis=0, keepdims=True)
        scale = p["gamma"] * jax.lax.rsqrt(var + EPS)
        shift = p["beta"] - mean * scale
        y = z * scale + shift
        h = jnp.where(y > 0, y, p["alpha"] * y)
    emb = h
    h1 = jnp.dot(emb.astype(jnp.bfloat16), head_params["w1"].astype(jnp.bfloat16),
                 preferred_element_type=jnp.float32) + head_params["b1"]
    h1 = jnp.maximum(h1, 0.0)
    logits = jnp.dot(h1.astype(jnp.bfloat16), head_params["w2"].astype(jnp.bfloat16),
                     preferred_element_type=jnp.float32) + head_params["b2"]
    return emb, logits, jnp.argmax(logits, axis=1)


# --------------------------------- main ------------------------------------ #
if __name__ == "__main__":
    num_nodes = 16
    input_dim, hidden_dim, output_dim = 8, 32, 16
    num_layers, num_classes = 3, 4

    key = jax.random.PRNGKey(0)
    key, xk = jax.random.split(key)
    x = jax.random.normal(xk, (num_nodes, input_dim), jnp.float32)

    # Deterministic bidirectional ring graph as edge_index [2, E].
    idx = jnp.arange(num_nodes, dtype=jnp.int32)
    fwd = jnp.stack([idx, (idx + 1) % num_nodes])
    bwd = jnp.stack([(idx + 1) % num_nodes, idx])
    edge_index = jnp.concatenate([fwd, bwd], axis=1)  # [2, 2*N]

    gnn_params, head_params = init_params(key, input_dim, hidden_dim, output_dim,
                                          num_layers, num_classes)

    emb, logits, out = contrastive_gnn_forward(gnn_params, head_params, x, edge_index)
    emb, logits, out = jax.block_until_ready((emb, logits, out))

    ref_emb, ref_logits, ref_out = reference_forward(gnn_params, head_params, x, edge_index)

    assert emb.shape == (num_nodes, output_dim)
    assert logits.shape == (num_nodes, num_classes)
    assert out.shape == (num_nodes,)
    assert jnp.allclose(emb, ref_emb, atol=2e-3, rtol=2e-3), "embedding mismatch vs reference"
    assert jnp.allclose(logits, ref_logits, atol=2e-3, rtol=2e-3), "logits mismatch vs reference"

    print("KERNEL_OK")
</pallas_src>

<mosaic_0001>
module attributes {stable_mosaic.version = 11 : i64} {
  func.func @fused_gnn_kernel(%arg0: i32, %arg1: memref<128x128xbf16, #tpu.memory_space<vmem>>, %arg2: memref<128x128xbf16, #tpu.memory_space<vmem>>, %arg3: memref<1x128x128xbf16, #tpu.memory_space<vmem>>, %arg4: memref<1x4x128xf32, #tpu.memory_space<vmem>>, %arg5: memref<128x128xbf16, #tpu.memory_space<vmem>>, %arg6: memref<1x128xf32, #tpu.memory_space<vmem>>, %arg7: memref<128x128xbf16, #tpu.memory_space<vmem>>, %arg8: memref<1x128xf32, #tpu.memory_space<vmem>>, %arg9: memref<128x128xf32, #tpu.memory_space<vmem>>, %arg10: memref<128x128xf32, #tpu.memory_space<vmem>>, %arg11: memref<128x128xbf16, #tpu.memory_space<vmem>>) attributes {dimension_semantics = [#tpu.dimension_semantics<arbitrary>], iteration_bounds = array<i64: 3>, scalar_prefetch = 0 : i64, scratch_operands = 1 : i64, tpu.core_type = #tpu.core_type<tc>, window_params = [{pipeline_mode = #tpu.pipeline_mode<synchronous>, transform_indices = @transform_0, window_bounds = array<i64: 128, 128>}, {pipeline_mode = #tpu.pipeline_mode<synchronous>, transform_indices = @transform_1, window_bounds = array<i64: 128, 128>}, {transform_indices = @transform_2, window_bounds = array<i64: 1, 128, 128>}, {transform_indices = @transform_3, window_bounds = array<i64: 1, 4, 128>}, {pipeline_mode = #tpu.pipeline_mode<synchronous>, transform_indices = @transform_4, window_bounds = array<i64: 128, 128>}, {pipeline_mode = #tpu.pipeline_mode<synchronous>, transform_indices = @transform_5, window_bounds = array<i64: 1, 128>}, {pipeline_mode = #tpu.pipeline_mode<synchronous>, transform_indices = @transform_6, window_bounds = array<i64: 128, 128>}, {pipeline_mode = #tpu.pipeline_mode<synchronous>, transform_indices = @transform_7, window_bounds = array<i64: 1, 128>}, {pipeline_mode = #tpu.pipeline_mode<synchronous>, transform_indices = @transform_8, window_bounds = array<i64: 128, 128>}, {pipeline_mode = #tpu.pipeline_mode<synchronous>, transform_indices = @transform_9, window_bounds = array<i64: 128, 128>}]} {
    %c0_i32 = arith.constant 0 : i32
    %0 = arith.cmpi eq, %arg0, %c0_i32 : i32
    %1 = arith.extui %0 : i1 to i32
    %c0_i32_0 = arith.constant 0 : i32
    %2 = arith.cmpi ne, %1, %c0_i32_0 : i32
    scf.if %2 {
      %c0_22 = arith.constant 0 : index
      %c0_23 = arith.constant 0 : index
      %61 = vector.load %arg2[%c0_22, %c0_23] : memref<128x128xbf16, #tpu.memory_space<vmem>>, vector<128x128xbf16>
      %c0_24 = arith.constant 0 : index
      %c0_25 = arith.constant 0 : index
      %62 = vector.load %arg11[%c0_24, %c0_25] : memref<128x128xbf16, #tpu.memory_space<vmem>>, vector<128x128xbf16>
      tpu.vector_store %arg11[%c0_24, %c0_25], %61 {strides = array<i32>} : memref<128x128xbf16, #tpu.memory_space<vmem>>, vector<128x128xbf16>,
    } else {
    }
    %c0 = arith.constant 0 : index
    %c0_1 = arith.constant 0 : index
    %c0_2 = arith.constant 0 : index
    %3 = vector.load %arg4[%c0, %c0_1, %c0_2] : memref<1x4x128xf32, #tpu.memory_space<vmem>>, vector<1x4x128xf32>
    %4 = vector.shape_cast %3 : vector<1x4x128xf32> to vector<4x128xf32>
    %5 = vector.extract_strided_slice %4 {offsets = [0, 0], sizes = [1, 128], strides = [1, 1]} : vector<4x128xf32> to vector<1x128xf32>
    %6 = vector.extract_strided_slice %4 {offsets = [1, 0], sizes = [1, 128], strides = [1, 1]} : vector<4x128xf32> to vector<1x128xf32>
    %7 = vector.extract_strided_slice %4 {offsets = [2, 0], sizes = [1, 128], strides = [1, 1]} : vector<4x128xf32> to vector<1x128xf32>
    %8 = vector.extract_strided_slice %4 {offsets = [3, 0], sizes = [1, 128], strides = [1, 1]} : vector<4x128xf32> to vector<1x128xf32>
    %c0_3 = arith.constant 0 : index
    %c0_4 = arith.constant 0 : index
    %9 = vector.load %arg11[%c0_3, %c0_4] : memref<128x128xbf16, #tpu.memory_space<vmem>>, vector<128x128xbf16>
    %c0_5 = arith.constant 0 : index
    %c0_6 = arith.constant 0 : index
    %c0_7 = arith.constant 0 : index
    %10 = vector.load %arg3[%c0_5, %c0_6, %c0_7] : memref<1x128x128xbf16, #tpu.memory_space<vmem>>, vector<1x128x128xbf16>
    %11 = vector.shape_cast %10 : vector<1x128x128xbf16> to vector<128x128xbf16>
    %cst = arith.constant dense<0.000000e+00> : vector<128x128xf32>
    %12 = tpu.matmul %9, %11, %cst {dimension_numbers = #tpu.dot_dimension_numbers<[1], [0], [0], [1], [0, 0, 1, 1], [], []>} : vector<128x128xbf16>, vector<128x128xbf16>, vector<128x128xf32> -> vector<128x128xf32>
    %c0_8 = arith.constant 0 : index
    %c0_9 = arith.constant 0 : index
    %13 = vector.load %arg1[%c0_8, %c0_9] : memref<128x128xbf16, #tpu.memory_space<vmem>>, vector<128x128xbf16>
    %14 = arith.truncf %12 : vector<128x128xf32> to vector<128x128xbf16>
    %cst_10 = arith.constant dense<0.000000e+00> : vector<128x128xf32>
    %15 = tpu.matmul %13, %14, %cst_10 {dimension_numbers = #tpu.dot_dimension_numbers<[1], [0], [0], [1], [0, 0, 1, 1], [], []>} : vector<128x128xbf16>, vector<128x128xbf16>, vector<128x128xf32> -> vector<128x128xf32>
    %16 = vector.broadcast %5 : vector<1x128xf32> to vector<128x128xf32>
    %17 = arith.addf %15, %16 : vector<128x128xf32>
    %18 = tpu.iota {dimensions = array<i32: 0>} : vector<128x1xi32>
    %c16_i32 = arith.constant 16 : i32
    %19 = vector.broadcast %c16_i32 : i32 to vector<128x1xi32>
    %20 = arith.cmpi slt, %18, %19 : vector<128x1xi32>
    %cst_11 = arith.constant 0.000000e+00 : f32
    %21 = vector.shape_cast %20 : vector<128x1xi1> to vector<128x1xi1>
    %22 = vector.broadcast %21 : vector<128x1xi1> to vector<128x128xi1>
    %23 = vector.broadcast %cst_11 : f32 to vector<128x128xf32>
    %24 = arith.select %22, %17, %23 : vector<128x128xi1>, vector<128x128xf32>
    %cst_12 = arith.constant dense<0.000000e+00> : vector<128xf32>
    %25 = vector.multi_reduction <add>, %24, %cst_12 [0] : vector<128x128xf32> to vector<128xf32>
    %26 = vector.shape_cast %25 : vector<128xf32> to vector<1x128xf32>
    %cst_13 = arith.constant 6.250000e-02 : f32
    %27 = vector.broadcast %cst_13 : f32 to vector<1x128xf32>
    %28 = arith.mulf %26, %27 : vector<1x128xf32>
    %29 = vector.broadcast %28 : vector<1x128xf32> to vector<128x128xf32>
    %30 = arith.subf %17, %29 : vector<128x128xf32>
    %31 = arith.mulf %30, %30 : vector<128x128xf32>
    %cst_14 = arith.constant 0.000000e+00 : f32
    %32 = vector.shape_cast %20 : vector<128x1xi1> to vector<128x1xi1>
    %33 = vector.broadcast %32 : vector<128x1xi1> to vector<128x128xi1>
    %34 = vector.broadcast %cst_14 : f32 to vector<128x128xf32>
    %35 = arith.select %33, %31, %34 : vector<128x128xi1>, vector<128x128xf32>
    %cst_15 = arith.constant dense<0.000000e+00> : vector<128xf32>
    %36 = vector.multi_reduction <add>, %35, %cst_15 [0] : vector<128x128xf32> to vector<128xf32>
    %37 = vector.shape_cast %36 : vector<128xf32> to vector<1x128xf32>
    %cst_16 = arith.constant 6.250000e-02 : f32
    %38 = vector.broadcast %cst_16 : f32 to vector<1x128xf32>
    %39 = arith.mulf %37, %38 : vector<1x128xf32>
    %cst_17 = arith.constant 9.99999974E-6 : f32
    %40 = vector.broadcast %cst_17 : f32 to vector<1x128xf32>
    %41 = arith.addf %39, %40 : vector<1x128xf32>
    %42 = math.rsqrt %41 : vector<1x128xf32>
    %43 = arith.mulf %6, %42 : vector<1x128xf32>
    %44 = arith.mulf %28, %43 : vector<1x128xf32>
    %45 = arith.subf %7, %44 : vector<1x128xf32>
    %46 = vector.broadcast %43 : vector<1x128xf32> to vector<128x128xf32>
    %47 = arith.mulf %17, %46 : vector<128x128xf32>
    %48 = vector.broadcast %45 : vector<1x128xf32> to vector<128x128xf32>
    %49 = arith.addf %47, %48 : vector<128x128xf32>
    %cst_18 = arith.constant 0.000000e+00 : f32
    %50 = vector.broadcast %cst_18 : f32 to vector<128x128xf32>
    %51 = arith.cmpf ogt, %49, %50 : vector<128x128xf32>
    %52 = vector.broadcast %8 : vector<1x128xf32> to vector<128x128xf32>
    %53 = arith.mulf %52, %49 : vector<128x128xf32>
    %54 = arith.select %51, %49, %53 : vector<128x128xi1>, vector<128x128xf32>
    %c2_i32 = arith.constant 2 : i32
    %55 = arith.cmpi slt, %arg0, %c2_i32 : i32
    %56 = arith.extui %55 : i1 to i32
    %c0_i32_19 = arith.constant 0 : i32
    %57 = arith.cmpi ne, %56, %c0_i32_19 : i32
    scf.if %57 {
      %61 = arith.truncf %54 : vector<128x128xf32> to vector<128x128xbf16>
      %c0_22 = arith.constant 0 : index
      %c0_23 = arith.constant 0 : index
      %62 = vector.load %arg11[%c0_22, %c0_23] : memref<128x128xbf16, #tpu.memory_space<vmem>>, vector<128x128xbf16>
      tpu.vector_store %arg11[%c0_22, %c0_23], %61 {strides = array<i32>} : memref<128x128xbf16, #tpu.memory_space<vmem>>, vector<128x128xbf16>,
    } else {
    }
    %c2_i32_20 = arith.constant 2 : i32
    %58 = arith.cmpi eq, %arg0, %c2_i32_20 : i32
    %59 = arith.extui %58 : i1 to i32
    %c0_i32_21 = arith.constant 0 : i32
    %60 = arith.cmpi ne, %59, %c0_i32_21 : i32
    scf.if %60 {
      %c0_22 = arith.constant 0 : index
      %c0_23 = arith.constant 0 : index
      %61 = vector.load %arg9[%c0_22, %c0_23] : memref<128x128xf32, #tpu.memory_space<vmem>>, vector<128x128xf32>
      tpu.vector_store %arg9[%c0_22, %c0_23], %54 {strides = array<i32>} : memref<128x128xf32, #tpu.memory_space<vmem>>, vector<128x128xf32>,
      %62 = arith.truncf %54 : vector<128x128xf32> to vector<128x128xbf16>
      %c0_24 = arith.constant 0 : index
      %c0_25 = arith.constant 0 : index
      %63 = vector.load %arg5[%c0_24, %c0_25] : memref<128x128xbf16, #tpu.memory_space<vmem>>, vector<128x128xbf16>
      %cst_26 = arith.constant dense<0.000000e+00> : vector<128x128xf32>
      %64 = tpu.matmul %62, %63, %cst_26 {dimension_numbers = #tpu.dot_dimension_numbers<[1], [0], [0], [1], [0, 0, 1, 1], [], []>} : vector<128x128xbf16>, vector<128x128xbf16>, vector<128x128xf32> -> vector<128x128xf32>
      %c0_27 = arith.constant 0 : index
      %c0_28 = arith.constant 0 : index
      %65 = vector.load %arg6[%c0_27, %c0_28] : memref<1x128xf32, #tpu.memory_space<vmem>>, vector<1x128xf32>
      %66 = vector.broadcast %65 : vector<1x128xf32> to vector<128x128xf32>
      %67 = arith.addf %64, %66 : vector<128x128xf32>
      %cst_29 = arith.constant 0.000000e+00 : f32
      %68 = vector.broadcast %cst_29 : f32 to vector<128x128xf32>
      %69 = arith.maximumf %67, %68 : vector<128x128xf32>
      %70 = arith.truncf %69 : vector<128x128xf32> to vector<128x128xbf16>
      %c0_30 = arith.constant 0 : index
      %c0_31 = arith.constant 0 : index
      %71 = vector.load %arg7[%c0_30, %c0_31] : memref<128x128xbf16, #tpu.memory_space<vmem>>, vector<128x128xbf16>
      %cst_32 = arith.constant dense<0.000000e+00> : vector<128x128xf32>
      %72 = tpu.matmul %70, %71, %cst_32 {dimension_numbers = #tpu.dot_dimension_numbers<[1], [0], [0], [1], [0, 0, 1, 1], [], []>} : vector<128x128xbf16>, vector<128x128xbf16>, vector<128x128xf32> -> vector<128x128xf32>
      %c0_33 = arith.constant 0 : index
      %c0_34 = arith.constant 0 : index
      %73 = vector.load %arg8[%c0_33, %c0_34] : memref<1x128xf32, #tpu.memory_space<vmem>>, vector<1x128xf32>
      %74 = vector.broadcast %73 : vector<1x128xf32> to vector<128x128xf32>
      %75 = arith.addf %72, %74 : vector<128x128xf32>
      %c0_35 = arith.constant 0 : index
      %c0_36 = arith.constant 0 : index
      %76 = vector.load %arg10[%c0_35, %c0_36] : memref<128x128xf32, #tpu.memory_space<vmem>>, vector<128x128xf32>
      tpu.vector_store %arg10[%c0_35, %c0_36], %75 {strides = array<i32>} : memref<128x128xf32, #tpu.memory_space<vmem>>, vector<128x128xf32>,
    } else {
    }
    return
  }
  func.func @transform_0(%arg0: i32) -> (i32, i32) {
    %c0_i32 = arith.constant 0 : i32
    %c0_i32_0 = arith.constant 0 : i32
    %c0_i32_1 = arith.constant 0 : i32
    return %c0_i32, %c0_i32_0 : i32, i32
  }
  func.func @transform_1(%arg0: i32) -> (i32, i32) {
    %c0_i32 = arith.constant 0 : i32
    %c0_i32_0 = arith.constant 0 : i32
    %c0_i32_1 = arith.constant 0 : i32
    return %c0_i32, %c0_i32_0 : i32, i32
  }
  func.func @transform_2(%arg0: i32) -> (i32, i32, i32) {
    %c0_i32 = arith.constant 0 : i32
    %c0_i32_0 = arith.constant 0 : i32
    %c0_i32_1 = arith.constant 0 : i32
    return %arg0, %c0_i32, %c0_i32_0 : i32, i32, i32
  }
  func.func @transform_3(%arg0: i32) -> (i32, i32, i32) {
    %c0_i32 = arith.constant 0 : i32
    %c0_i32_0 = arith.constant 0 : i32
    %c0_i32_1 = arith.constant 0 : i32
    return %arg0, %c0_i32, %c0_i32_0 : i32, i32, i32
  }
  func.func @transform_4(%arg0: i32) -> (i32, i32) {
    %c0_i32 = arith.constant 0 : i32
    %c0_i32_0 = arith.constant 0 : i32
    %c0_i32_1 = arith.constant 0 : i32
    return %c0_i32, %c0_i32_0 : i32, i32
  }
  func.func @transform_5(%arg0: i32) -> (i32, i32) {
    %c0_i32 = arith.constant 0 : i32
    %c0_i32_0 = arith.constant 0 : i32
    %c0_i32_1 = arith.constant 0 : i32
    return %c0_i32, %c0_i32_0 : i32, i32
  }
  func.func @transform_6(%arg0: i32) -> (i32, i32) {
    %c0_i32 = arith.constant 0 : i32
    %c0_i32_0 = arith.constant 0 : i32
    %c0_i32_1 = arith.constant 0 : i32
    return %c0_i32, %c0_i32_0 : i32, i32
  }
  func.func @transform_7(%arg0: i32) -> (i32, i32) {
    %c0_i32 = arith.constant 0 : i32
    %c0_i32_0 = arith.constant 0 : i32
    %c0_i32_1 = arith.constant 0 : i32
    return %c0_i32, %c0_i32_0 : i32, i32
  }
  func.func @transform_8(%arg0: i32) -> (i32, i32) {
    %c0_i32 = arith.constant 0 : i32
    %c0_i32_0 = arith.constant 0 : i32
    %c0_i32_1 = arith.constant 0 : i32
    return %c0_i32, %c0_i32_0 : i32, i32
  }
  func.func @transform_9(%arg0: i32) -> (i32, i32) {
    %c0_i32 = arith.constant 0 : i32
    %c0_i32_0 = arith.constant 0 : i32
    %c0_i32_1 = arith.constant 0 : i32
    return %c0_i32, %c0_i32_0 : i32, i32
  }
}

</mosaic_0001>

<llo_original>
// kernel: tpu_custom_call.1
$region0: #{tpu_custom_call.1}
  #allocation0 [shape = 'u32[]', space=smem, size = 0x4, offset = 0x4, fixed_abs, tag = 'smem constant byte address 0x4 - core index']
  #allocation1 [shape = 'u32[144,128]{1,0:T(1,128)}', space=vmem, size = 0x12000, scoped, tag = 'internal scratch']
  #allocation2 [shape = 'bf16[128,128]{1,0:T(16,128)(2,1)}', space=vmem, size = 0x8000, scoped, tag = 'scratch operand']
  %s0 = inlined_call_operand.hbm [shape: bf16[128,128], index: 0, kind: input, shape index: {}]
  %s1 = inlined_call_operand.hbm [shape: bf16[128,128], index: 1, kind: input, shape index: {}]
  %s2 = inlined_call_operand.hbm [shape: bf16[3,128,128], index: 2, kind: input, shape index: {}]
  %s3 = inlined_call_operand.hbm [shape: f32[3,4,128], index: 3, kind: input, shape index: {}]
  %s4 = inlined_call_operand.hbm [shape: bf16[128,128], index: 4, kind: input, shape index: {}]
  %s5 = inlined_call_operand.vmem [shape: f32[1,128], index: 5, kind: input, shape index: {}]
  %s6 = inlined_call_operand.hbm [shape: bf16[128,128], index: 6, kind: input, shape index: {}]
  %s7 = inlined_call_operand.vmem [shape: f32[1,128], index: 7, kind: input, shape index: {}]
  %s8 = inlined_call_operand.hbm [shape: f32[128,128], index: 8, kind: output, shape index: {0}]
  %s9 = inlined_call_operand.hbm [shape: f32[128,128], index: 9, kind: output, shape index: {1}]
  %10 = xla_tuple %s8, %s9
  %s11 = sld [smem:[#allocation0]]
  $region109: #{tpu_custom_call.1} parent=0
    _
  %s13 = ssub.s32 1, %s11
  %s14 = scalar_select 0, %s13, %s11
  $region1: #{tpu_custom_call.1} parent=0
    #allocation3 [shape = 'u8[32768]{0}', space=vmem, size = 0x8000, scoped, tag = 'input window, operand 0, single buffered']
    #allocation4 [shape = 's32[2]{0}', space=sflag, size = 0x8, scoped, tag = 'scoped memory for tpu_custom_call.1']
    #allocation5 [shape = 's32[2]{0}', space=sflag, size = 0x8, scoped, tag = 'scoped memory for tpu_custom_call.1']
    #allocation6 [shape = 'u8[32768]{0}', space=vmem, size = 0x8000, scoped, tag = 'input window, operand 1, single buffered']
    #allocation7 [shape = 's32[1]{0}', space=sflag, size = 0x4, scoped, tag = 'scoped memory for tpu_custom_call.1']
    #allocation8 [shape = 'u8[65536]{0}', space=vmem, size = 0x10000, scoped, tag = 'input window, operand 2']
    #allocation9 [shape = 'u8[4096]{0}', space=vmem, size = 0x1000, scoped, tag = 'input window, operand 3']
    #allocation10 [shape = 'u8[32768]{0}', space=vmem, size = 0x8000, scoped, tag = 'input window, operand 4, single buffered']
    #allocation11 [shape = 'u8[32768]{0}', space=vmem, size = 0x8000, scoped, tag = 'input window, operand 6, single buffered']
    #allocation12 [shape = 's32[1]{0}', space=sflag, size = 0x4, scoped, tag = 'scoped memory for tpu_custom_call.1']
    #allocation13 [shape = 'u8[65536]{0}', space=vmem, size = 0x10000, scoped, tag = 'output window, operand 0, single buffered']
    #allocation14 [shape = 'u8[65536]{0}', space=vmem, size = 0x10000, scoped, tag = 'output window, operand 1, single buffered']
    #allocation15 [shape = 's32[1]{0}', space=sflag, size = 0x4, scoped, tag = 'scoped memory for tpu_custom_call.1']
    %15 = vsyncpa [#allocation4], 0
    %16 = vsyncpa [#allocation7], 0
    %17 = vsyncpa [#allocation12], 0
    %18 = vsyncpa [#allocation5], 0
    %19 = vsyncpa [#allocation15], 0
    loop: start=0, step=1, limit=5
    $region2: #{tpu_custom_call.1} parent=1 // loop_pre_header
      _
    $region3: #{tpu_custom_call.1} parent=1 // loop_header
      %s21 = sphi 0, %s25
      %p22 = scmp.ge.s32.totalorder %s21, 5
      %s29 = sphi 0, %s29
      %s31 = sphi 0, %s29
      %s32 = sphi 0, %s31
      %s46 = sphi 0, %s32
      %s50 = sphi 0, %s50
      %s52 = sphi 0, %s50
      %s53 = sphi 0, %s52
      %s67 = sphi 0, %s53
      %s73 = sphi 0, %s75
      %s76 = sphi 0, %s73
      %s77 = sphi 0, %s76
      %s93 = sphi 0, %s77
      %s99 = sphi 0, %s101
      %s102 = sphi 0, %s99
      %s103 = sphi 0, %s102
      %s119 = sphi 0, %s103
      %s123 = sphi 0, %s123
      %s125 = sphi 0, %s123
      %s126 = sphi 0, %s125
      %s140 = sphi 0, %s126
      %s144 = sphi 0, %s144
      %s146 = sphi 0, %s144
      %s147 = sphi 0, %s146
      %s161 = sphi 0, %s147
      %s165 = sphi 0, %s165
      %s167 = sphi 0, %s165
      %s168 = sphi 0, %s167
      %s182 = sphi 0, %s168
      %s186 = sphi 0, %s186
      %s188 = sphi 0, %s186
      %s189 = sphi 0, %s188
      %s203 = sphi 0, %s189
      %s207 = sphi 0, %s207
      %s209 = sphi 0, %s207
      %s210 = sphi 0, %s209
      %s224 = sphi 0, %s210
      %s228 = sphi 0, %s228
      %s230 = sphi 0, %s228
      %s231 = sphi 0, %s230
      %s245 = sphi 0, %s231
    $region4: #{tpu_custom_call.1} parent=1 // loop_header_branch
      %24 = sbr.rel (%p22) target = $region8
    $region5: #{tpu_custom_call.1} parent=1 // loop_body
      %s26 = ssub.s32 %s21, 1
      %s27 = ssub.s32 %s21, 2
      %s28 = sadd.s32 %s21, 1
      %s30 = sadd.s32 %s29, 1
      %p33 = scmp.eq.s32.totalorder %s21, 2
      %p34 = scmp.ne.s32.totalorder %s29, %s31
      %p35 = scmp.eq.s32.totalorder %s21, 0
      %p36 = por %p34, %p35
      %p37 = scmp.ne.s32.totalorder %s29, %s31
      %p38 = scmp.eq.s32.totalorder %s26, 2
      %p39 = por %p37, %p38
      %p40 = scmp.ne.s32.totalorder %s31, %s32
      %p41 = scmp.eq.s32.totalorder %s26, 0
      %p42 = por %p40, %p41
      %p43 = scmp.ne.s32.totalorder %s31, %s32
      %p44 = scmp.eq.s32.totalorder %s27, 2
      %p45 = por %p43, %p44
      %p47 = scmp.ne.s32.totalorder %s32, %s46
      %p48 = scmp.eq.s32.totalorder %s27, 0
      %p49 = por %p47, %p48
      %s51 = sadd.s32 %s50, 1
      %p54 = scmp.eq.s32.totalorder %s21, 2
      %p55 = scmp.ne.s32.totalorder %s50, %s52
      %p56 = scmp.eq.s32.totalorder %s21, 0
      %p57 = por %p55, %p56
      %p58 = scmp.ne.s32.totalorder %s50, %s52
      %p59 = scmp.eq.s32.totalorder %s26, 2
      %p60 = por %p58, %p59
      %p61 = scmp.ne.s32.totalorder %s52, %s53
      %p62 = scmp.eq.s32.totalorder %s26, 0
      %p63 = por %p61, %p62
      %p64 = scmp.ne.s32.totalorder %s52, %s53
      %p65 = scmp.eq.s32.totalorder %s27, 2
      %p66 = por %p64, %p65
      %p68 = scmp.ne.s32.totalorder %s53, %s67
      %p69 = scmp.eq.s32.totalorder %s27, 0
      %p70 = por %p68, %p69
      %s71 = ssub.s32 %s21, %s28
      %p72 = scmp.eq.s32.totalorder %s71, 0
      %s74 = sadd.s32 %s73, 1
      %s75 = scalar_select %p72, %s73, %s74
      %p78 = pneg %p72
      %p79 = scmp.eq.s32.totalorder %s21, 2
      %p80 = por %p78, %p79
      %p81 = scmp.ne.s32.totalorder %s73, %s76
      %p82 = scmp.eq.s32.totalorder %s21, 0
      %p83 = por %p81, %p82
      %p84 = scmp.ne.s32.totalorder %s73, %s76
      %p85 = scmp.eq.s32.totalorder %s26, 2
      %p86 = por %p84, %p85
      %p87 = scmp.ne.s32.totalorder %s76, %s77
      %p88 = scmp.eq.s32.totalorder %s26, 0
      %p89 = por %p87, %p88
      %p90 = scmp.ne.s32.totalorder %s76, %s77
      %p91 = scmp.eq.s32.totalorder %s27, 2
      %p92 = por %p90, %p91
      %p94 = scmp.ne.s32.totalorder %s77, %s93
      %p95 = scmp.eq.s32.totalorder %s27, 0
      %p96 = por %p94, %p95
      %s97 = ssub.s32 %s21, %s28
      %p98 = scmp.eq.s32.totalorder %s97, 0
      %s100 = sadd.s32 %s99, 1
      %s101 = scalar_select %p98, %s99, %s100
      %p104 = pneg %p98
      %p105 = scmp.eq.s32.totalorder %s21, 2
      %p106 = por %p104, %p105
      %p107 = scmp.ne.s32.totalorder %s99, %s102
      %p108 = scmp.eq.s32.totalorder %s21, 0
      %p109 = por %p107, %p108
      %p110 = scmp.ne.s32.totalorder %s99, %s102
      %p111 = scmp.eq.s32.totalorder %s26, 2
      %p112 = por %p110, %p111
      %p113 = scmp.ne.s32.totalorder %s102, %s103
      %p114 = scmp.eq.s32.totalorder %s26, 0
      %p115 = por %p113, %p114
      %p116 = scmp.ne.s32.totalorder %s102, %s103
      %p117 = scmp.eq.s32.totalorder %s27, 2
      %p118 = por %p116, %p117
      %p120 = scmp.ne.s32.totalorder %s103, %s119
      %p121 = scmp.eq.s32.totalorder %s27, 0
      %p122 = por %p120, %p121
      %s124 = sadd.s32 %s123, 1
      %p127 = scmp.eq.s32.totalorder %s21, 2
      %p128 = scmp.ne.s32.totalorder %s123, %s125
      %p129 = scmp.eq.s32.totalorder %s21, 0
      %p130 = por %p128, %p129
      %p131 = scmp.ne.s32.totalorder %s123, %s125
      %p132 = scmp.eq.s32.totalorder %s26, 2
      %p133 = por %p131, %p132
      %p134 = scmp.ne.s32.totalorder %s125, %s126
      %p135 = scmp.eq.s32.totalorder %s26, 0
      %p136 = por %p134, %p135
      %p137 = scmp.ne.s32.totalorder %s125, %s126
      %p138 = scmp.eq.s32.totalorder %s27, 2
      %p139 = por %p137, %p138
      %p141 = scmp.ne.s32.totalorder %s126, %s140
      %p142 = scmp.eq.s32.totalorder %s27, 0
      %p143 = por %p141, %p142
      %s145 = sadd.s32 %s144, 1
      %p148 = scmp.eq.s32.totalorder %s21, 2
      %p149 = scmp.ne.s32.totalorder %s144, %s146
      %p150 = scmp.eq.s32.totalorder %s21, 0
      %p151 = por %p149, %p150
      %p152 = scmp.ne.s32.totalorder %s144, %s146
      %p153 = scmp.eq.s32.totalorder %s26, 2
      %p154 = por %p152, %p153
      %p155 = scmp.ne.s32.totalorder %s146, %s147
      %p156 = scmp.eq.s32.totalorder %s26, 0
      %p157 = por %p155, %p156
      %p158 = scmp.ne.s32.totalorder %s146, %s147
      %p159 = scmp.eq.s32.totalorder %s27, 2
      %p160 = por %p158, %p159
      %p162 = scmp.ne.s32.totalorder %s147, %s161
      %p163 = scmp.eq.s32.totalorder %s27, 0
      %p164 = por %p162, %p163
      %s166 = sadd.s32 %s165, 1
      %p169 = scmp.eq.s32.totalorder %s21, 2
      %p170 = scmp.ne.s32.totalorder %s165, %s167
      %p171 = scmp.eq.s32.totalorder %s21, 0
      %p172 = por %p170, %p171
      %p173 = scmp.ne.s32.totalorder %s165, %s167
      %p174 = scmp.eq.s32.totalorder %s26, 2
      %p175 = por %p173, %p174
      %p176 = scmp.ne.s32.totalorder %s167, %s168
      %p177 = scmp.eq.s32.totalorder %s26, 0
      %p178 = por %p176, %p177
      %p179 = scmp.ne.s32.totalorder %s167, %s168
      %p180 = scmp.eq.s32.totalorder %s27, 2
      %p181 = por %p179, %p180
      %p183 = scmp.ne.s32.totalorder %s168, %s182
      %p184 = scmp.eq.s32.totalorder %s27, 0
      %p185 = por %p183, %p184
      %s187 = sadd.s32 %s186, 1
      %p190 = scmp.eq.s32.totalorder %s21, 2
      %p191 = scmp.ne.s32.totalorder %s186, %s188
      %p192 = scmp.eq.s32.totalorder %s21, 0
      %p193 = por %p191, %p192
      %p194 = scmp.ne.s32.totalorder %s186, %s188
      %p195 = scmp.eq.s32.totalorder %s26, 2
      %p196 = por %p194, %p195
      %p197 = scmp.ne.s32.totalorder %s188, %s189
      %p198 = scmp.eq.s32.totalorder %s26, 0
      %p199 = por %p197, %p198
      %p200 = scmp.ne.s32.totalorder %s188, %s189
      %p201 = scmp.eq.s32.totalorder %s27, 2
      %p202 = por %p200, %p201
      %p204 = scmp.ne.s32.totalorder %s189, %s203
      %p205 = scmp.eq.s32.totalorder %s27, 0
      %p206 = por %p204, %p205
      %s208 = sadd.s32 %s207, 1
      %p211 = scmp.eq.s32.totalorder %s21, 2
      %p212 = scmp.ne.s32.totalorder %s207, %s209
      %p213 = scmp.eq.s32.totalorder %s21, 0
      %p214 = por %p212, %p213
      %p215 = scmp.ne.s32.totalorder %s207, %s209
      %p216 = scmp.eq.s32.totalorder %s26, 2
      %p217 = por %p215, %p216
      %p218 = scmp.ne.s32.totalorder %s209, %s210
      %p219 = scmp.eq.s32.totalorder %s26, 0
      %p220 = por %p218, %p219
      %p221 = scmp.ne.s32.totalorder %s209, %s210
      %p222 = scmp.eq.s32.totalorder %s27, 2
      %p223 = por %p221, %p222
      %p225 = scmp.ne.s32.totalorder %s210, %s224
      %p226 = scmp.eq.s32.totalorder %s27, 0
      %p227 = por %p225, %p226
      %s229 = sadd.s32 %s228, 1
      %p232 = scmp.eq.s32.totalorder %s21, 2
      %p233 = scmp.ne.s32.totalorder %s228, %s230
      %p234 = scmp.eq.s32.totalorder %s21, 0
      %p235 = por %p233, %p234
      %p236 = scmp.ne.s32.totalorder %s228, %s230
      %p237 = scmp.eq.s32.totalorder %s26, 2
      %p238 = por %p236, %p237
      %p239 = scmp.ne.s32.totalorder %s230, %s231
      %p240 = scmp.eq.s32.totalorder %s26, 0
      %p241 = por %p239, %p240
      %p242 = scmp.ne.s32.totalorder %s230, %s231
      %p243 = scmp.eq.s32.totalorder %s27, 2
      %p244 = por %p242, %p243
      %p246 = scmp.ne.s32.totalorder %s231, %s245
      %p247 = scmp.eq.s32.totalorder %s27, 0
      %p248 = por %p246, %p247
      %p249 = scmp.le.s32.totalorder 1, %s21
      %p250 = scmp.lt.s32.totalorder %s21, 4
      %p251 = pnand %p249, %p250
      %p252 = pneg %p251
      // Predicated region
      $region9: #{tpu_custom_call.1} parent=5 // pred_check
        _
      $region10: #{tpu_custom_call.1} parent=5 // pred_check_branch
        %254 = sbr.rel (%p251) target = $region12
      $region11: #{tpu_custom_call.1} parent=5 // pred_region
        %s255 = ssub.s32 %s21, 1
        // Predicated region
        $region13: #{tpu_custom_call.1} parent=11 // pred_check
          %p256 = pneg %p42
        $region14: #{tpu_custom_call.1} parent=11 // pred_check_branch
          %258 = sbr.rel (%p256) target = $region16
        $region15: #{tpu_custom_call.1} parent=11 // pred_region
          %s260 = ssub.s32 1024, 1024
          %261 = vsyncadd [#allocation4], %s260
          %s262 = sshll.u32 [#allocation3], 4
          %s263 = int_to_ptr.vmem [resolvable:$true] %s262
          %268 = dma.hbm_to_vmem [thread:$0]  %s0, 1024, %s263, [#allocation4], 64, 64, 4
        $region16: #{tpu_custom_call.1} parent=11 // pred_fallthru
          _
        // Predicated region
        $region17: #{tpu_custom_call.1} parent=11 // pred_check
          %p269 = pneg %p63
        $region18: #{tpu_custom_call.1} parent=11 // pred_check_branch
          %271 = sbr.rel (%p269) target = $region20
        $region19: #{tpu_custom_call.1} parent=11 // pred_region
          %s273 = ssub.s32 1024, 1024
          %274 = vsyncadd [#allocation7], %s273
          %s275 = sshll.u32 [#allocation6], 4
          %s276 = int_to_ptr.vmem [resolvable:$true] %s275
          %281 = dma.hbm_to_vmem [thread:$0]  %s1, 1024, %s276, [#allocation7], 64, 64, 4
        $region20: #{tpu_custom_call.1} parent=11 // pred_fallthru
          _
        // Predicated region
        $region21: #{tpu_custom_call.1} parent=11 // pred_check
          %p282 = pneg %p136
        $region22: #{tpu_custom_call.1} parent=11 // pred_check_branch
          %284 = sbr.rel (%p282) target = $region24
        $region23: #{tpu_custom_call.1} parent=11 // pred_region
          %s286 = ssub.s32 1024, 1024
          %287 = vsyncadd [#allocation7], %s286
          %s288 = sshll.u32 [#allocation10], 4
          %s289 = int_to_ptr.vmem [resolvable:$true] %s288
          %294 = dma.hbm_to_vmem [thread:$0]  %s4, 1024, %s289, [#allocation7], 64, 64, 4
        $region24: #{tpu_custom_call.1} parent=11 // pred_fallthru
          _
        // Predicated region
        $region25: #{tpu_custom_call.1} parent=11 // pred_check
          %p295 = pneg %p157
        $region26: #{tpu_custom_call.1} parent=11 // pred_check_branch
          %297 = sbr.rel (%p295) target = $region28
        $region27: #{tpu_custom_call.1} parent=11 // pred_region
          _
        $region28: #{tpu_custom_call.1} parent=11 // pred_fallthru
          _
        // Predicated region
        $region29: #{tpu_custom_call.1} parent=11 // pred_check
          %p298 = pneg %p178
        $region30: #{tpu_custom_call.1} parent=11 // pred_check_branch
          %300 = sbr.rel (%p298) target = $region32
        $region31: #{tpu_custom_call.1} parent=11 // pred_region
          %s302 = ssub.s32 1024, 1024
          %303 = vsyncadd [#allocation12], %s302
          %s304 = sshll.u32 [#allocation11], 4
          %s305 = int_to_ptr.vmem [resolvable:$true] %s304
          %310 = dma.hbm_to_vmem [thread:$0]  %s6, 1024, %s305, [#allocation12], 64, 64, 4
        $region32: #{tpu_custom_call.1} parent=11 // pred_fallthru
          _
        // Predicated region
        $region33: #{tpu_custom_call.1} parent=11 // pred_check
          %p311 = pneg %p199
        $region34: #{tpu_custom_call.1} parent=11 // pred_check_branch
          %313 = sbr.rel (%p311) target = $region36
        $region35: #{tpu_custom_call.1} parent=11 // pred_region
          _
        $region36: #{tpu_custom_call.1} parent=11 // pred_fallthru
          _
      $region12: #{tpu_custom_call.1} parent=5 // pred_fallthru
        _
      %p314 = scmp.lt.s32.totalorder %s21, 3
      // Predicated region
      $region37: #{tpu_custom_call.1} parent=5 // pred_check
        %p315 = pneg %p314
      $region38: #{tpu_custom_call.1} parent=5 // pred_check_branch
        %317 = sbr.rel (%p315) target = $region40
      $region39: #{tpu_custom_call.1} parent=5 // pred_region
        // Predicated region
        $region41: #{tpu_custom_call.1} parent=39 // pred_check
          %p318 = pneg %p83
        $region42: #{tpu_custom_call.1} parent=39 // pred_check_branch
          %320 = sbr.rel (%p318) target = $region44
        $region43: #{tpu_custom_call.1} parent=39 // pred_region
          %s321 = sand.u32 %s21, 1
          %s322 = scalar_lea.sflag [#allocation4], %s321
          %s323 = sand.u32 %s73, 1
          %s324 = smul.addr %s323, 64
          %s325 = scalar_lea.vmem [#allocation8], %s324
          %s327 = ssub.s32 1024, 1024
          %328 = vsyncadd %s322, %s327
          %s329 = smul.addr %s21, 16
          %s330 = smul.addr %s329, 64
          %s331 = scalar_lea.hbm %s2, %s330
          %s332 = sshll.u32 %s325, 4
          %s333 = int_to_ptr.vmem [resolvable:$true] %s332
          %338 = dma.hbm_to_vmem [thread:$0]  %s331, 1024, %s333, %s322, 64, 64, 4
        $region44: #{tpu_custom_call.1} parent=39 // pred_fallthru
          _
        // Predicated region
        $region45: #{tpu_custom_call.1} parent=39 // pred_check
          %p339 = pneg %p109
        $region46: #{tpu_custom_call.1} parent=39 // pred_check_branch
          %341 = sbr.rel (%p339) target = $region48
        $region47: #{tpu_custom_call.1} parent=39 // pred_region
          %s342 = sand.u32 %s21, 1
          %s343 = scalar_lea.sflag [#allocation4], %s342
          %s344 = sand.u32 %s99, 1
          %s345 = smul.addr %s344, 4
          %s346 = scalar_lea.vmem [#allocation9], %s345
          %s348 = ssub.s32 64, 64
          %349 = vsyncadd %s343, %s348
          %s350 = smul.addr %s21, 64
          %s351 = scalar_lea.hbm %s3, %s350
          %s353 = sshll.u32 %s346, 4
          %s354 = int_to_ptr.vmem [resolvable:$true] %s353
          %356 = dma.hbm_to_vmem [thread:$0]  %s351, 64, %s354, %s343
        $region48: #{tpu_custom_call.1} parent=39 // pred_fallthru
          _
      $region40: #{tpu_custom_call.1} parent=5 // pred_fallthru
        _
      %p357 = scmp.le.s32.totalorder 1, %s21
      %p358 = scmp.lt.s32.totalorder %s21, 4
      %p359 = pnand %p357, %p358
      %p360 = pneg %p359
      // Predicated region
      $region49: #{tpu_custom_call.1} parent=5 // pred_check
        _
      $region50: #{tpu_custom_call.1} parent=5 // pred_check_branch
        %362 = sbr.rel (%p359) target = $region52
      $region51: #{tpu_custom_call.1} parent=5 // pred_region
        %s363 = ssub.s32 %s21, 1
        // Predicated region
        $region53: #{tpu_custom_call.1} parent=51 // pred_check
          %p364 = pneg %p42
        $region54: #{tpu_custom_call.1} parent=51 // pred_check_branch
          %366 = sbr.rel (%p364) target = $region56
        $region55: #{tpu_custom_call.1} parent=51 // pred_region
          %367 = dma.done [#allocation4], 1024
        $region56: #{tpu_custom_call.1} parent=51 // pred_fallthru
          _
        // Predicated region
        $region57: #{tpu_custom_call.1} parent=51 // pred_check
          %p368 = pneg %p63
        $region58: #{tpu_custom_call.1} parent=51 // pred_check_branch
          %370 = sbr.rel (%p368) target = $region60
        $region59: #{tpu_custom_call.1} parent=51 // pred_region
          %371 = dma.done [#allocation7], 1024
        $region60: #{tpu_custom_call.1} parent=51 // pred_fallthru
          _
        %s372 = sand.u32 %s26, 1
        %s373 = scalar_lea.sflag [#allocation4], %s372
        %s374 = sand.u32 %s76, 1
        %s375 = smul.addr %s374, 64
        %s376 = scalar_lea.vmem [#allocation8], %s375
        // Predicated region
        $region61: #{tpu_custom_call.1} parent=51 // pred_check
          %p377 = pneg %p89
        $region62: #{tpu_custom_call.1} parent=51 // pred_check_branch
          %379 = sbr.rel (%p377) target = $region64
        $region63: #{tpu_custom_call.1} parent=51 // pred_region
          %380 = dma.done %s373, 1024
        $region64: #{tpu_custom_call.1} parent=51 // pred_fallthru
          _
        %s381 = sand.u32 %s26, 1
        %s382 = scalar_lea.sflag [#allocation4], %s381
        %s383 = sand.u32 %s102, 1
        %s384 = smul.addr %s383, 4
        %s385 = scalar_lea.vmem [#allocation9], %s384
        // Predicated region
        $region65: #{tpu_custom_call.1} parent=51 // pred_check
          %p386 = pneg %p115
        $region66: #{tpu_custom_call.1} parent=51 // pred_check_branch
          %388 = sbr.rel (%p386) target = $region68
        $region67: #{tpu_custom_call.1} parent=51 // pred_region
          %389 = dma.done %s382, 64
        $region68: #{tpu_custom_call.1} parent=51 // pred_fallthru
          _
        // Predicated region
        $region69: #{tpu_custom_call.1} parent=51 // pred_check
          %p390 = pneg %p136
        $region70: #{tpu_custom_call.1} parent=51 // pred_check_branch
          %392 = sbr.rel (%p390) target = $region72
        $region71: #{tpu_custom_call.1} parent=51 // pred_region
          %393 = dma.done [#allocation7], 1024
        $region72: #{tpu_custom_call.1} parent=51 // pred_fallthru
          _
        // Predicated region
        $region73: #{tpu_custom_call.1} parent=51 // pred_check
          %p394 = pneg %p178
        $region74: #{tpu_custom_call.1} parent=51 // pred_check_branch
          %396 = sbr.rel (%p394) target = $region76
        $region75: #{tpu_custom_call.1} parent=51 // pred_region
          %397 = dma.done [#allocation12], 1024
        $region76: #{tpu_custom_call.1} parent=51 // pred_fallthru
          _
        %p398 = pneg %p42
        %p399 = pneg %p39
        %p400 = pneg %p63
        %p401 = pneg %p60
        %s402 = sand.u32 %s26, 1
        %s403 = scalar_lea.sflag [#allocation4], %s402
        %s404 = sand.u32 %s76, 1
        %s405 = smul.addr %s404, 64
        %s406 = scalar_lea.vmem [#allocation8], %s405
        %p407 = pneg %p89
        %p408 = pneg %p86
        %s409 = sand.u32 %s26, 1
        %s410 = scalar_lea.sflag [#allocation4], %s409
        %s411 = sand.u32 %s102, 1
        %s412 = smul.addr %s411, 4
        %s413 = scalar_lea.vmem [#allocation9], %s412
        %p414 = pneg %p115
        %p415 = pneg %p112
        %p416 = pneg %p136
        %p417 = pneg %p133
        %p418 = pneg %p157
        %p419 = pneg %p154
        %p420 = pneg %p178
        %p421 = pneg %p175
        %p422 = pneg %p199
        %p423 = pneg %p196
        %p424 = pneg %p220
        %p425 = pneg %p217
        %p426 = pneg %p241
        %p427 = pneg %p238
        %p429 = scmp.eq.s32.totalorder %s26, 0
        // Predicated region
        $region77: #{tpu_custom_call.1} parent=51 // pred_check
          %p430 = pneg %p429
        $region78: #{tpu_custom_call.1} parent=51 // pred_check_branch
          %432 = sbr.rel (%p430) target = $region80
        $region79: #{tpu_custom_call.1} parent=51 // pred_region
          %v433 = vld [vmem:[#allocation6] sm:$0xf]
          %v434 = vld [vmem:[#allocation6 + $0x4] sm:$0xf]
          %v435 = vld [vmem:[#allocation6 + $0x8] sm:$0xf]
          %v436 = vld [vmem:[#allocation6 + $0xc] sm:$0xf]
          %v437 = vld [vmem:[#allocation6 + $0x10] sm:$0xf]
          %v438 = vld [vmem:[#allocation6 + $0x14] sm:$0xf]
          %v439 = vld [vmem:[#allocation6 + $0x18] sm:$0xf]
          %v440 = vld [vmem:[#allocation6 + $0x1c] sm:$0xf]
          %v441 = vld [vmem:[#allocation6 + $0x20] sm:$0xf]
          %v442 = vld [vmem:[#allocation6 + $0x24] sm:$0xf]
          %v443 = vld [vmem:[#allocation6 + $0x28] sm:$0xf]
          %v444 = vld [vmem:[#allocation6 + $0x2c] sm:$0xf]
          %v445 = vld [vmem:[#allocation6 + $0x30] sm:$0xf]
          %v446 = vld [vmem:[#allocation6 + $0x34] sm:$0xf]
          %v447 = vld [vmem:[#allocation6 + $0x38] sm:$0xf]
          %v448 = vld [vmem:[#allocation6 + $0x3c] sm:$0xf]
          %v465 = vunpack.c.l.b16 %v433
          %v466 = vunpack.c.l.b16 %v434
          %v467 = vunpack.c.l.b16 %v435
          %v468 = vunpack.c.l.b16 %v436
          %v469 = vunpack.c.l.b16 %v437
          %v470 = vunpack.c.l.b16 %v438
          %v471 = vunpack.c.l.b16 %v439
          %v472 = vunpack.c.l.b16 %v440
          %v473 = vunpack.c.l.b16 %v441
          %v474 = vunpack.c.l.b16 %v442
          %v475 = vunpack.c.l.b16 %v443
          %v476 = vunpack.c.l.b16 %v444
          %v477 = vunpack.c.l.b16 %v445
          %v478 = vunpack.c.l.b16 %v446
          %v479 = vunpack.c.l.b16 %v447
          %v480 = vunpack.c.l.b16 %v448
          %v481 = vpack.c.b16 %v466, %v465
          %v482 = vpack.c.b16 %v468, %v467
          %v483 = vpack.c.b16 %v470, %v469
          %v484 = vpack.c.b16 %v472, %v471
          %v485 = vpack.c.b16 %v474, %v473
          %v486 = vpack.c.b16 %v476, %v475
          %v487 = vpack.c.b16 %v478, %v477
          %v488 = vpack.c.b16 %v480, %v479
          %497 = vst [vmem:[#allocation2] sm:$0xff] %v481
          %498 = vst [vmem:[#allocation2 + $0x8] sm:$0xff] %v482
          %499 = vst [vmem:[#allocation2 + $0x10] sm:$0xff] %v483
          %500 = vst [vmem:[#allocation2 + $0x18] sm:$0xff] %v484
          %501 = vst [vmem:[#allocation2 + $0x20] sm:$0xff] %v485
          %502 = vst [vmem:[#allocation2 + $0x28] sm:$0xff] %v486
          %503 = vst [vmem:[#allocation2 + $0x30] sm:$0xff] %v487
          %504 = vst [vmem:[#allocation2 + $0x38] sm:$0xff] %v488
        $region80: #{tpu_custom_call.1} parent=51 // pred_fallthru
          _
        %v505 = vld [vmem:[%s385] sm:$0xf]
        %v506 = vld [vmem:[#allocation2] sm:$0xff]
        %v507 = vld [vmem:[#allocation2 + $0x8] sm:$0xff]
        %v508 = vld [vmem:[#allocation2 + $0x10] sm:$0xff]
        %v509 = vld [vmem:[#allocation2 + $0x18] sm:$0xff]
        %v510 = vld [vmem:[#allocation2 + $0x20] sm:$0xff]
        %v511 = vld [vmem:[#allocation2 + $0x28] sm:$0xff]
        %v512 = vld [vmem:[#allocation2 + $0x30] sm:$0xff]
        %v513 = vld [vmem:[#allocation2 + $0x38] sm:$0xff]
        %v514 = vld [vmem:[%s376] sm:$0xf]
        %v515 = vld [vmem:[%s376 + $0x4] sm:$0xf]
        %v516 = vld [vmem:[%s376 + $0x8] sm:$0xf]
        %v517 = vld [vmem:[%s376 + $0xc] sm:$0xf]
        %v518 = vld [vmem:[%s376 + $0x10] sm:$0xf]
        %v519 = vld [vmem:[%s376 + $0x14] sm:$0xf]
        %v520 = vld [vmem:[%s376 + $0x18] sm:$0xf]
        %v521 = vld [vmem:[%s376 + $0x1c] sm:$0xf]
        %v522 = vld [vmem:[%s376 + $0x20] sm:$0xf]
        %v523 = vld [vmem:[%s376 + $0x24] sm:$0xf]
        %v524 = vld [vmem:[%s376 + $0x28] sm:$0xf]
        %v525 = vld [vmem:[%s376 + $0x2c] sm:$0xf]
        %v526 = vld [vmem:[%s376 + $0x30] sm:$0xf]
        %v527 = vld [vmem:[%s376 + $0x34] sm:$0xf]
        %v528 = vld [vmem:[%s376 + $0x38] sm:$0xf]
        %v529 = vld [vmem:[%s376 + $0x3c] sm:$0xf]
        %v546 = vunpack.c.l.b16 %v514
        %v547 = vunpack.c.l.b16 %v515
        %v548 = vunpack.c.l.b16 %v516
        %v549 = vunpack.c.l.b16 %v517
        %v550 = vunpack.c.l.b16 %v518
        %v551 = vunpack.c.l.b16 %v519
        %v552 = vunpack.c.l.b16 %v520
        %v553 = vunpack.c.l.b16 %v521
        %v554 = vunpack.c.l.b16 %v522
        %v555 = vunpack.c.l.b16 %v523
        %v556 = vunpack.c.l.b16 %v524
        %v557 = vunpack.c.l.b16 %v525
        %v558 = vunpack.c.l.b16 %v526
        %v559 = vunpack.c.l.b16 %v527
        %v560 = vunpack.c.l.b16 %v528
        %v561 = vunpack.c.l.b16 %v529
        %v562 = vpack.c.b16 %v547, %v546
        %v563 = vpack.c.b16 %v549, %v548
        %v564 = vpack.c.b16 %v551, %v550
        %v565 = vpack.c.b16 %v553, %v552
        %v566 = vpack.c.b16 %v555, %v554
        %v567 = vpack.c.b16 %v557, %v556
        %v568 = vpack.c.b16 %v559, %v558
        %v569 = vpack.c.b16 %v561, %v560
        %578 = vmatprep.subr.bf16.mxu0 0
        %579 = vmatpush1.bf16.msra.mxu0 %v562
        %580 = vmatprep.subr.bf16.mxu0 0
        %581 = vmatpush1.bf16.msra.mxu0 %v563
        %582 = vmatprep.subr.bf16.mxu0 0
        %583 = vmatpush1.bf16.msra.mxu0 %v564
        %584 = vmatprep.subr.bf16.mxu0 0
        %585 = vmatpush1.bf16.msra.mxu0 %v565
        %586 = vmatprep.subr.bf16.mxu0 0
        %587 = vmatpush1.bf16.msra.mxu0 %v566
        %588 = vmatprep.subr.bf16.mxu0 0
        %589 = vmatpush1.bf16.msra.mxu0 %v567
        %590 = vmatprep.subr.bf16.mxu0 0
        %591 = vmatpush1.bf16.msra.mxu0 %v568
        %592 = vmatprep.subr.bf16.mxu0 0
        %593 = vmatpush1.bf16.msra.mxu0 %v569
        %594 = vmatprep.subr.bf16.mxu0 0
        %595 = vmatpush1.bf16.msra.mxu0 0
        %596 = vmatprep.subr.bf16.mxu0 0
        %597 = vmatpush1.bf16.msra.mxu0 0
        %598 = vmatprep.subr.bf16.mxu0 0
        %599 = vmatpush1.bf16.msra.mxu0 0
        %600 = vmatprep.subr.bf16.mxu0 0
        %601 = vmatpush1.bf16.msra.mxu0 0
        %602 = vmatprep.subr.bf16.mxu0 0
        %603 = vmatpush1.bf16.msra.mxu0 0
        %604 = vmatprep.subr.bf16.mxu0 0
        %605 = vmatpush1.bf16.msra.mxu0 0
        %606 = vmatprep.subr.bf16.mxu0 0
        %607 = vmatpush1.bf16.msra.mxu0 0
        %608 = vmatprep.subr.bf16.mxu0 0
        %609 = vmatpush1.bf16.msra.mxu0 0
        %610 = vmatprep.mubr.bf16.mxu0 0
        %611 = vmatmul.mubr.bf16.gmra.mrb[0].mxu0 %v506
        %v612 = vpop.f32.mrb[0].mxu0
        %v613 = vadd.f32 0.0, %v612
        %v614 = vpop.f32.mrb[0].mxu0
        %v615 = vpop.f32.mrb[0].mxu0
        %v616 = vadd.f32 0.0, %v615
        %v617 = vpop.f32.mrb[0].mxu0
        %618 = vmatprep.mubr.bf16.mxu0 0
        %619 = vmatmul.mubr.bf16.gmra.mrb[0].mxu0 %v507
        %v620 = vpop.f32.mrb[0].mxu0
        %v621 = vadd.f32 0.0, %v620
        %v622 = vpop.f32.mrb[0].mxu0
        %v623 = vpop.f32.mrb[0].mxu0
        %v624 = vadd.f32 0.0, %v623
        %v625 = vpop.f32.mrb[0].mxu0
        %626 = vmatprep.mubr.bf16.mxu0 0
        %627 = vmatmul.mubr.bf16.gmra.mrb[0].mxu0 %v508
        %v628 = vpop.f32.mrb[0].mxu0
        %v629 = vadd.f32 0.0, %v628
        %v630 = vpop.f32.mrb[0].mxu0
        %v631 = vpop.f32.mrb[0].mxu0
        %v632 = vadd.f32 0.0, %v631
        %v633 = vpop.f32.mrb[0].mxu0
        %634 = vmatprep.mubr.bf16.mxu0 0
        %635 = vmatmul.mubr.bf16.gmra.mrb[0].mxu0 %v509
        %v636 = vpop.f32.mrb[0].mxu0
        %v637 = vadd.f32 0.0, %v636
        %v638 = vpop.f32.mrb[0].mxu0
        %v639 = vpop.f32.mrb[0].mxu0
        %v640 = vadd.f32 0.0, %v639
        %v641 = vpop.f32.mrb[0].mxu0
        %642 = vmatprep.mubr.bf16.mxu0 0
        %643 = vmatmul.mubr.bf16.gmra.mrb[0].mxu0 %v510
        %v644 = vpop.f32.mrb[0].mxu0
        %v645 = vadd.f32 0.0, %v644
        %v646 = vpop.f32.mrb[0].mxu0
        %v647 = vpop.f32.mrb[0].mxu0
        %v648 = vadd.f32 0.0, %v647
        %v649 = vpop.f32.mrb[0].mxu0
        %650 = vmatprep.mubr.bf16.mxu0 0
        %651 = vmatmul.mubr.bf16.gmra.mrb[0].mxu0 %v511
        %v652 = vpop.f32.mrb[0].mxu0
        %v653 = vadd.f32 0.0, %v652
        %v654 = vpop.f32.mrb[0].mxu0
        %v655 = vpop.f32.mrb[0].mxu0
        %v656 = vadd.f32 0.0, %v655
        %v657 = vpop.f32.mrb[0].mxu0
        %658 = vmatprep.mubr.bf16.mxu0 0
        %659 = vmatmul.mubr.bf16.gmra.mrb[0].mxu0 %v512
        %v660 = vpop.f32.mrb[0].mxu0
        %v661 = vadd.f32 0.0, %v660
        %v662 = vpop.f32.mrb[0].mxu0
        %v663 = vpop.f32.mrb[0].mxu0
        %v664 = vadd.f32 0.0, %v663
        %v665 = vpop.f32.mrb[0].mxu0
        %666 = vmatprep.mubr.bf16.mxu0 0
        %667 = vmatmul.mubr.bf16.gmra.mrb[0].mxu0 %v513
        %v668 = vpop.f32.mrb[0].mxu0
        %v669 = vadd.f32 0.0, %v668
        %v670 = vpop.f32.mrb[0].mxu0
        %v671 = vpop.f32.mrb[0].mxu0
        %v672 = vadd.f32 0.0, %v671
        %v673 = vpop.f32.mrb[0].mxu0
        %674 = vdwg.mxu0
        %v675 = vld [vmem:[#allocation3] sm:$0xf]
        %v676 = vld [vmem:[#allocation3 + $0x4] sm:$0xf]
        %v677 = vld [vmem:[#allocation3 + $0x8] sm:$0xf]
        %v678 = vld [vmem:[#allocation3 + $0xc] sm:$0xf]
        %v679 = vld [vmem:[#allocation3 + $0x10] sm:$0xf]
        %v680 = vld [vmem:[#allocation3 + $0x14] sm:$0xf]
        %v681 = vld [vmem:[#allocation3 + $0x18] sm:$0xf]
        %v682 = vld [vmem:[#allocation3 + $0x1c] sm:$0xf]
        %v683 = vld [vmem:[#allocation3 + $0x20] sm:$0xf]
        %v684 = vld [vmem:[#allocation3 + $0x24] sm:$0xf]
        %v685 = vld [vmem:[#allocation3 + $0x28] sm:$0xf]
        %v686 = vld [vmem:[#allocation3 + $0x2c] sm:$0xf]
        %v687 = vld [vmem:[#allocation3 + $0x30] sm:$0xf]
        %v688 = vld [vmem:[#allocation3 + $0x34] sm:$0xf]
        %v689 = vld [vmem:[#allocation3 + $0x38] sm:$0xf]
        %v690 = vld [vmem:[#allocation3 + $0x3c] sm:$0xf]
        %v691 = vpack.c.bf16 %v616, %v613
        %v692 = vpack.c.bf16 %v624, %v621
        %v693 = vpack.c.bf16 %v632, %v629
        %v694 = vpack.c.bf16 %v640, %v637
        %v695 = vpack.c.bf16 %v648, %v645
        %v696 = vpack.c.bf16 %v656, %v653
        %v697 = vpack.c.bf16 %v664, %v661
        %v698 = vpack.c.bf16 %v672, %v669
        %v699 = vlaneseq
        %v700 = vshrl.u32 %v699, 7
        %v701 = vsub.s32 0, %v700
        %v702 = vrot.slane %v505, %v701
        %v719 = vunpack.c.l.b16 %v675
        %v720 = vunpack.c.l.b16 %v676
        %v721 = vunpack.c.l.b16 %v677
        %v722 = vunpack.c.l.b16 %v678
        %v723 = vunpack.c.l.b16 %v679
        %v724 = vunpack.c.l.b16 %v680
        %v725 = vunpack.c.l.b16 %v681
        %v726 = vunpack.c.l.b16 %v682
        %v727 = vunpack.c.l.b16 %v683
        %v728 = vunpack.c.l.b16 %v684
        %v729 = vunpack.c.l.b16 %v685
        %v730 = vunpack.c.l.b16 %v686
        %v731 = vunpack.c.l.b16 %v687
        %v732 = vunpack.c.l.b16 %v688
        %v733 = vunpack.c.l.b16 %v689
        %v734 = vunpack.c.l.b16 %v690
        %v735 = vpack.c.b16 %v720, %v719
        %v736 = vpack.c.b16 %v722, %v721
        %v737 = vpack.c.b16 %v724, %v723
        %v738 = vpack.c.b16 %v726, %v725
        %v739 = vpack.c.b16 %v728, %v727
        %v740 = vpack.c.b16 %v730, %v729
        %v741 = vpack.c.b16 %v732, %v731
        %v742 = vpack.c.b16 %v734, %v733
        %751 = vmatprep.subr.bf16.mxu0 0
        %752 = vmatpush1.bf16.msra.mxu0 %v691
        %753 = vmatprep.subr.bf16.mxu0 0
        %754 = vmatpush1.bf16.msra.mxu0 %v692
        %755 = vmatprep.subr.bf16.mxu0 0
        %756 = vmatpush1.bf16.msra.mxu0 %v693
        %757 = vmatprep.subr.bf16.mxu0 0
        %758 = vmatpush1.bf16.msra.mxu0 %v694
        %759 = vmatprep.subr.bf16.mxu0 0
        %760 = vmatpush1.bf16.msra.mxu0 %v695
        %761 = vmatprep.subr.bf16.mxu0 0
        %762 = vmatpush1.bf16.msra.mxu0 %v696
        %763 = vmatprep.subr.bf16.mxu0 0
        %764 = vmatpush1.bf16.msra.mxu0 %v697
        %765 = vmatprep.subr.bf16.mxu0 0
        %766 = vmatpush1.bf16.msra.mxu0 %v698
        %767 = vmatprep.subr.bf16.mxu0 0
        %768 = vmatpush1.bf16.msra.mxu0 0
        %769 = vmatprep.subr.bf16.mxu0 0
        %770 = vmatpush1.bf16.msra.mxu0 0
        %771 = vmatprep.subr.bf16.mxu0 0
        %772 = vmatpush1.bf16.msra.mxu0 0
        %773 = vmatprep.subr.bf16.mxu0 0
        %774 = vmatpush1.bf16.msra.mxu0 0
        %775 = vmatprep.subr.bf16.mxu0 0
        %776 = vmatpush1.bf16.msra.mxu0 0
        %777 = vmatprep.subr.bf16.mxu0 0
        %778 = vmatpush1.bf16.msra.mxu0 0
        %779 = vmatprep.subr.bf16.mxu0 0
        %780 = vmatpush1.bf16.msra.mxu0 0
        %781 = vmatprep.subr.bf16.mxu0 0
        %782 = vmatpush1.bf16.msra.mxu0 0
        %783 = vmatprep.mubr.bf16.mxu0 0
        %784 = vmatmul.mubr.bf16.gmra.mrb[0].mxu0 %v735
        %v785 = vpop.f32.mrb[0].mxu0
        %v786 = vadd.f32 %v702, %v785
        %v787 = vpop.f32.mrb[0].mxu0
        %v788 = vpop.f32.mrb[0].mxu0
        %v789 = vadd.f32 %v702, %v788
        %v790 = vpop.f32.mrb[0].mxu0
        %791 = vmatprep.mubr.bf16.mxu0 0
        %792 = vmatmul.mubr.bf16.gmra.mrb[0].mxu0 %v736
        %v793 = vpop.f32.mrb[0].mxu0
        %v794 = vadd.f32 %v702, %v793
        %v795 = vpop.f32.mrb[0].mxu0
        %v796 = vpop.f32.mrb[0].mxu0
        %v797 = vadd.f32 %v702, %v796
        %v798 = vpop.f32.mrb[0].mxu0
        %799 = vmatprep.mubr.bf16.mxu0 0
        %800 = vmatmul.mubr.bf16.gmra.mrb[0].mxu0 %v737
        %v801 = vpop.f32.mrb[0].mxu0
        %v802 = vadd.f32 %v702, %v801
        %v803 = vpop.f32.mrb[0].mxu0
        %v804 = vpop.f32.mrb[0].mxu0
        %v805 = vadd.f32 %v702, %v804
        %v806 = vpop.f32.mrb[0].mxu0
        %807 = vmatprep.mubr.bf16.mxu0 0
        %808 = vmatmul.mubr.bf16.gmra.mrb[0].mxu0 %v738
        %v809 = vpop.f32.mrb[0].mxu0
        %v810 = vadd.f32 %v702, %v809
        %v811 = vpop.f32.mrb[0].mxu0
        %v812 = vpop.f32.mrb[0].mxu0
        %v813 = vadd.f32 %v702, %v812
        %v814 = vpop.f32.mrb[0].mxu0
        %815 = vmatprep.mubr.bf16.mxu0 0
        %816 = vmatmul.mubr.bf16.gmra.mrb[0].mxu0 %v739
        %v817 = vpop.f32.mrb[0].mxu0
        %v818 = vadd.f32 %v702, %v817
        %v819 = vpop.f32.mrb[0].mxu0
        %v820 = vpop.f32.mrb[0].mxu0
        %v821 = vadd.f32 %v702, %v820
        %v822 = vpop.f32.mrb[0].mxu0
        %823 = vmatprep.mubr.bf16.mxu0 0
        %824 = vmatmul.mubr.bf16.gmra.mrb[0].mxu0 %v740
        %v825 = vpop.f32.mrb[0].mxu0
        %v826 = vadd.f32 %v702, %v825
        %v827 = vpop.f32.mrb[0].mxu0
        %v828 = vpop.f32.mrb[0].mxu0
        %v829 = vadd.f32 %v702, %v828
        %v830 = vpop.f32.mrb[0].mxu0
        %831 = vmatprep.mubr.bf16.mxu0 0
        %832 = vmatmul.mubr.bf16.gmra.mrb[0].mxu0 %v741
        %v833 = vpop.f32.mrb[0].mxu0
        %v834 = vadd.f32 %v702, %v833
        %v835 = vpop.f32.mrb[0].mxu0
        %v836 = vpop.f32.mrb[0].mxu0
        %v837 = vadd.f32 %v702, %v836
        %v838 = vpop.f32.mrb[0].mxu0
        %839 = vmatprep.mubr.bf16.mxu0 0
        %840 = vmatmul.mubr.bf16.gmra.mrb[0].mxu0 %v742
        %v841 = vpop.f32.mrb[0].mxu0
        %v842 = vadd.f32 %v702, %v841
        %v843 = vpop.f32.mrb[0].mxu0
        %v844 = vpop.f32.mrb[0].mxu0
        %v845 = vadd.f32 %v702, %v844
        %v846 = vpop.f32.mrb[0].mxu0
        %847 = vdwg.mxu0
        %v848 = vlaneseq
        %v849 = vshrl.u32 %v848, 7
        %v850 = vadd.s32 %v849, 8
        %v851 = vadd.s32 %v849, 16
        %v852 = vadd.s32 %v849, 24
        %v853 = vadd.s32 %v849, 32
        %v854 = vadd.s32 %v849, 40
        %v855 = vadd.s32 %v849, 48
        %v856 = vadd.s32 %v849, 56
        %v857 = vadd.s32 %v849, 64
        %v858 = vadd.s32 %v849, 72
        %v859 = vadd.s32 %v849, 80
        %v860 = vadd.s32 %v849, 88
        %v861 = vadd.s32 %v849, 96
        %v862 = vadd.s32 %v849, 104
        %v863 = vadd.s32 %v849, 112
        %v864 = vadd.s32 %v849, 120
        %vm865 = vcmp.lt.s32.totalorder %v849, 16
        %vm866 = vcmp.lt.s32.totalorder %v850, 16
        %vm867 = vcmp.lt.s32.totalorder %v851, 16
        %vm868 = vcmp.lt.s32.totalorder %v852, 16
        %vm869 = vcmp.lt.s32.totalorder %v853, 16
        %vm870 = vcmp.lt.s32.totalorder %v854, 16
        %vm871 = vcmp.lt.s32.totalorder %v855, 16
        %vm872 = vcmp.lt.s32.totalorder %v856, 16
        %vm873 = vcmp.lt.s32.totalorder %v857, 16
        %vm874 = vcmp.lt.s32.totalorder %v858, 16
        %vm875 = vcmp.lt.s32.totalorder %v859, 16
        %vm876 = vcmp.lt.s32.totalorder %v860, 16
        %vm877 = vcmp.lt.s32.totalorder %v861, 16
        %vm878 = vcmp.lt.s32.totalorder %v862, 16
        %vm879 = vcmp.lt.s32.totalorder %v863, 16
        %vm880 = vcmp.lt.s32.totalorder %v864, 16
        %v881 = vsel %vm865, 1, 0
        %v882 = vsel %vm866, 1, 0
        %v883 = vsel %vm867, 1, 0
        %v884 = vsel %vm868, 1, 0
        %v885 = vsel %vm869, 1, 0
        %v886 = vsel %vm870, 1, 0
        %v887 = vsel %vm871, 1, 0
        %v888 = vsel %vm872, 1, 0
        %v889 = vsel %vm873, 1, 0
        %v890 = vsel %vm874, 1, 0
        %v891 = vsel %vm875, 1, 0
        %v892 = vsel %vm876, 1, 0
        %v893 = vsel %vm877, 1, 0
        %v894 = vsel %vm878, 1, 0
        %v895 = vsel %vm879, 1, 0
        %v896 = vsel %vm880, 1, 0
        %vm897 = vcmp.eq.s32.totalorder %v881, 1
        %vm898 = vcmp.eq.s32.totalorder %v882, 1
        %vm899 = vcmp.eq.s32.totalorder %v883, 1
        %vm900 = vcmp.eq.s32.totalorder %v884, 1
        %vm901 = vcmp.eq.s32.totalorder %v885, 1
        %vm902 = vcmp.eq.s32.totalorder %v886, 1
        %vm903 = vcmp.eq.s32.totalorder %v887, 1
        %vm904 = vcmp.eq.s32.totalorder %v888, 1
        %vm905 = vcmp.eq.s32.totalorder %v889, 1
        %vm906 = vcmp.eq.s32.totalorder %v890, 1
        %vm907 = vcmp.eq.s32.totalorder %v891, 1
        %vm908 = vcmp.eq.s32.totalorder %v892, 1
        %vm909 = vcmp.eq.s32.totalorder %v893, 1
        %vm910 = vcmp.eq.s32.totalorder %v894, 1
        %vm911 = vcmp.eq.s32.totalorder %v895, 1
        %vm912 = vcmp.eq.s32.totalorder %v896, 1
        %v913 = vsel %vm897, %v786, 0.0
        %v914 = vsel %vm898, %v789, 0.0
        %v915 = vsel %vm899, %v794, 0.0
        %v916 = vsel %vm900, %v797, 0.0
        %v917 = vsel %vm901, %v802, 0.0
        %v918 = vsel %vm902, %v805, 0.0
        %v919 = vsel %vm903, %v810, 0.0
        %v920 = vsel %vm904, %v813, 0.0
        %v921 = vsel %vm905, %v818, 0.0
        %v922 = vsel %vm906, %v821, 0.0
        %v923 = vsel %vm907, %v826, 0.0
        %v924 = vsel %vm908, %v829, 0.0
        %v925 = vsel %vm909, %v834, 0.0
        %v926 = vsel %vm910, %v837, 0.0
        %v927 = vsel %vm911, %v842, 0.0
        %v928 = vsel %vm912, %v845, 0.0
        %v929 = vadd.f32 %v913, %v914
        %v930 = vadd.f32 %v929, %v915
        %v931 = vadd.f32 %v930, %v916
        %v932 = vadd.f32 %v931, %v917
        %v933 = vadd.f32 %v932, %v918
        %v934 = vadd.f32 %v933, %v919
        %v935 = vadd.f32 %v934, %v920
        %v936 = vadd.f32 %v935, %v921
        %v937 = vadd.f32 %v936, %v922
        %v938 = vadd.f32 %v937, %v923
        %v939 = vadd.f32 %v938, %v924
        %v940 = vadd.f32 %v939, %v925
        %v941 = vadd.f32 %v940, %v926
        %v942 = vadd.f32 %v941, %v927
        %v943 = vadd.f32 %v942, %v928
        %v944 = vrot.slane %v943, 4
        %v945 = vadd.f32 %v943, %v944
        %v946 = vrot.slane %v945, 2
        %v947 = vadd.f32 %v945, %v946
        %v948 = vrot.slane %v947, 1
        %v949 = vadd.f32 %v947, %v948
        %v950 = vmul.f32 %v949, 0.0625
        %v951 = vsub.f32 %v786, %v950
        %v952 = vsub.f32 %v789, %v950
        %v953 = vsub.f32 %v794, %v950
        %v954 = vsub.f32 %v797, %v950
        %v955 = vsub.f32 %v802, %v950
        %v956 = vsub.f32 %v805, %v950
        %v957 = vsub.f32 %v810, %v950
        %v958 = vsub.f32 %v813, %v950
        %v959 = vsub.f32 %v818, %v950
        %v960 = vsub.f32 %v821, %v950
        %v961 = vsub.f32 %v826, %v950
        %v962 = vsub.f32 %v829, %v950
        %v963 = vsub.f32 %v834, %v950
        %v964 = vsub.f32 %v837, %v950
        %v965 = vsub.f32 %v842, %v950
        %v966 = vsub.f32 %v845, %v950
        %v967 = vmul.f32 %v951, %v951
        %v968 = vmul.f32 %v952, %v952
        %v969 = vmul.f32 %v953, %v953
        %v970 = vmul.f32 %v954, %v954
        %v971 = vmul.f32 %v955, %v955
        %v972 = vmul.f32 %v956, %v956
        %v973 = vmul.f32 %v957, %v957
        %v974 = vmul.f32 %v958, %v958
        %v975 = vmul.f32 %v959, %v959
        %v976 = vmul.f32 %v960, %v960
        %v977 = vmul.f32 %v961, %v961
        %v978 = vmul.f32 %v962, %v962
        %v979 = vmul.f32 %v963, %v963
        %v980 = vmul.f32 %v964, %v964
        %v981 = vmul.f32 %v965, %v965
        %v982 = vmul.f32 %v966, %v966
        %v983 = vsel %vm897, %v967, 0.0
        %v984 = vsel %vm898, %v968, 0.0
        %v985 = vsel %vm899, %v969, 0.0
        %v986 = vsel %vm900, %v970, 0.0
        %v987 = vsel %vm901, %v971, 0.0
        %v988 = vsel %vm902, %v972, 0.0
        %v989 = vsel %vm903, %v973, 0.0
        %v990 = vsel %vm904, %v974, 0.0
        %v991 = vsel %vm905, %v975, 0.0
        %v992 = vsel %vm906, %v976, 0.0
        %v993 = vsel %vm907, %v977, 0.0
        %v994 = vsel %vm908, %v978, 0.0
        %v995 = vsel %vm909, %v979, 0.0
        %v996 = vsel %vm910, %v980, 0.0
        %v997 = vsel %vm911, %v981, 0.0
        %v998 = vsel %vm912, %v982, 0.0
        %v999 = vadd.f32 %v983, %v984
        %v1000 = vadd.f32 %v999, %v985
        %v1001 = vadd.f32 %v1000, %v986
        %v1002 = vadd.f32 %v1001, %v987
        %v1003 = vadd.f32 %v1002, %v988
        %v1004 = vadd.f32 %v1003, %v989
        %v1005 = vadd.f32 %v1004, %v990
        %v1006 = vadd.f32 %v1005, %v991
        %v1007 = vadd.f32 %v1006, %v992
        %v1008 = vadd.f32 %v1007, %v993
        %v1009 = vadd.f32 %v1008, %v994
        %v1010 = vadd.f32 %v1009, %v995
        %v1011 = vadd.f32 %v1010, %v996
        %v1012 = vadd.f32 %v1011, %v997
        %v1013 = vadd.f32 %v1012, %v998
        %v1014 = vrot.slane %v1013, 4
        %v1015 = vadd.f32 %v1013, %v1014
        %v1016 = vrot.slane %v1015, 2
        %v1017 = vadd.f32 %v1015, %v1016
        %v1018 = vrot.slane %v1017, 1
        %v1019 = vadd.f32 %v1017, %v1018
        %v1020 = vmul.f32 %v1019, 0.0625
        %v1021 = vadd.f32 %v1020, 1e-05
        %v1022 = vrsqrt.pop %v1021
        %v1023 = vmul.f32 %v505, %v1022
        %v1024 = vmul.f32 %v950, %v1023
        %v1026 = vrot.slane %v1024, 7
        %v1028 = vsub.f32 %v505, %v1026
        %v1029 = vlaneseq
        %v1030 = vshrl.u32 %v1029, 7
        %v1031 = vsub.s32 1, %v1030
        %v1032 = vrot.slane %v1023, %v1031
        %v1033 = vmul.f32 %v786, %v1032
        %v1034 = vmul.f32 %v789, %v1032
        %v1035 = vmul.f32 %v794, %v1032
        %v1036 = vmul.f32 %v797, %v1032
        %v1037 = vmul.f32 %v802, %v1032
        %v1038 = vmul.f32 %v805, %v1032
        %v1039 = vmul.f32 %v810, %v1032
        %v1040 = vmul.f32 %v813, %v1032
        %v1041 = vmul.f32 %v818, %v1032
        %v1042 = vmul.f32 %v821, %v1032
        %v1043 = vmul.f32 %v826, %v1032
        %v1044 = vmul.f32 %v829, %v1032
        %v1045 = vmul.f32 %v834, %v1032
        %v1046 = vmul.f32 %v837, %v1032
        %v1047 = vmul.f32 %v842, %v1032
        %v1048 = vmul.f32 %v845, %v1032
        %v1049 = vlaneseq
        %v1050 = vshrl.u32 %v1049, 7
        %v1051 = vsub.s32 2, %v1050
        %v1052 = vrot.slane %v1028, %v1051
        %v1053 = vadd.f32 %v1033, %v1052
        %v1054 = vadd.f32 %v1034, %v1052
        %v1055 = vadd.f32 %v1035, %v1052
        %v1056 = vadd.f32 %v1036, %v1052
        %v1057 = vadd.f32 %v1037, %v1052
        %v1058 = vadd.f32 %v1038, %v1052
        %v1059 = vadd.f32 %v1039, %v1052
        %v1060 = vadd.f32 %v1040, %v1052
        %v1061 = vadd.f32 %v1041, %v1052
        %v1062 = vadd.f32 %v1042, %v1052
        %v1063 = vadd.f32 %v1043, %v1052
        %v1064 = vadd.f32 %v1044, %v1052
        %v1065 = vadd.f32 %v1045, %v1052
        %v1066 = vadd.f32 %v1046, %v1052
        %v1067 = vadd.f32 %v1047, %v1052
        %v1068 = vadd.f32 %v1048, %v1052
        %vm1069 = vcmp.gt.f32.partialorder %v1053, 0.0
        %vm1070 = vcmp.gt.f32.partialorder %v1054, 0.0
        %vm1071 = vcmp.gt.f32.partialorder %v1055, 0.0
        %vm1072 = vcmp.gt.f32.partialorder %v1056, 0.0
        %vm1073 = vcmp.gt.f32.partialorder %v1057, 0.0
        %vm1074 = vcmp.gt.f32.partialorder %v1058, 0.0
        %vm1075 = vcmp.gt.f32.partialorder %v1059, 0.0
        %vm1076 = vcmp.gt.f32.partialorder %v1060, 0.0
        %vm1077 = vcmp.gt.f32.partialorder %v1061, 0.0
        %vm1078 = vcmp.gt.f32.partialorder %v1062, 0.0
        %vm1079 = vcmp.gt.f32.partialorder %v1063, 0.0
        %vm1080 = vcmp.gt.f32.partialorder %v1064, 0.0
        %vm1081 = vcmp.gt.f32.partialorder %v1065, 0.0
        %vm1082 = vcmp.gt.f32.partialorder %v1066, 0.0
        %vm1083 = vcmp.gt.f32.partialorder %v1067, 0.0
        %vm1084 = vcmp.gt.f32.partialorder %v1068, 0.0
        %v1085 = vlaneseq
        %v1086 = vshrl.u32 %v1085, 7
        %v1087 = vsub.s32 3, %v1086
        %v1088 = vrot.slane %v505, %v1087
        %v1089 = vmul.f32 %v1088, %v1053
        %v1090 = vmul.f32 %v1088, %v1054
        %v1091 = vmul.f32 %v1088, %v1055
        %v1092 = vmul.f32 %v1088, %v1056
        %v1093 = vmul.f32 %v1088, %v1057
        %v1094 = vmul.f32 %v1088, %v1058
        %v1095 = vmul.f32 %v1088, %v1059
        %v1096 = vmul.f32 %v1088, %v1060
        %v1097 = vmul.f32 %v1088, %v1061
        %v1098 = vmul.f32 %v1088, %v1062
        %v1099 = vmul.f32 %v1088, %v1063
        %v1100 = vmul.f32 %v1088, %v1064
        %v1101 = vmul.f32 %v1088, %v1065
        %v1102 = vmul.f32 %v1088, %v1066
        %v1103 = vmul.f32 %v1088, %v1067
        %v1104 = vmul.f32 %v1088, %v1068
        %v1105 = vsel %vm1069, %v1053, %v1089
        %v1106 = vsel %vm1070, %v1054, %v1090
        %v1107 = vsel %vm1071, %v1055, %v1091
        %v1108 = vsel %vm1072, %v1056, %v1092
        %v1109 = vsel %vm1073, %v1057, %v1093
        %v1110 = vsel %vm1074, %v1058, %v1094
        %v1111 = vsel %vm1075, %v1059, %v1095
        %v1112 = vsel %vm1076, %v1060, %v1096
        %v1113 = vsel %vm1077, %v1061, %v1097
        %v1114 = vsel %vm1078, %v1062, %v1098
        %v1115 = vsel %vm1079, %v1063, %v1099
        %v1116 = vsel %vm1080, %v1064, %v1100
        %v1117 = vsel %vm1081, %v1065, %v1101
        %v1118 = vsel %vm1082, %v1066, %v1102
        %v1119 = vsel %vm1083, %v1067, %v1103
        %v1120 = vsel %vm1084, %v1068, %v1104
        %p1121 = scmp.lt.s32.totalorder %s26, 2
        // Predicated region
        $region81: #{tpu_custom_call.1} parent=51 // pred_check
          %p1122 = pneg %p1121
        $region82: #{tpu_custom_call.1} parent=51 // pred_check_branch
          %1124 = sbr.rel (%p1122) target = $region84
        $region83: #{tpu_custom_call.1} parent=51 // pred_region
          %v1125 = vpack.c.bf16 %v1106, %v1105
          %v1126 = vpack.c.bf16 %v1108, %v1107
          %v1127 = vpack.c.bf16 %v1110, %v1109
          %v1128 = vpack.c.bf16 %v1112, %v1111
          %v1129 = vpack.c.bf16 %v1114, %v1113
          %v1130 = vpack.c.bf16 %v1116, %v1115
          %v1131 = vpack.c.bf16 %v1118, %v1117
          %v1132 = vpack.c.bf16 %v1120, %v1119
          %1133 = vst [vmem:[#allocation2] sm:$0xff] %v1125
          %1134 = vst [vmem:[#allocation2 + $0x8] sm:$0xff] %v1126
          %1135 = vst [vmem:[#allocation2 + $0x10] sm:$0xff] %v1127
          %1136 = vst [vmem:[#allocation2 + $0x18] sm:$0xff] %v1128
          %1137 = vst [vmem:[#allocation2 + $0x20] sm:$0xff] %v1129
          %1138 = vst [vmem:[#allocation2 + $0x28] sm:$0xff] %v1130
          %1139 = vst [vmem:[#allocation2 + $0x30] sm:$0xff] %v1131
          %1140 = vst [vmem:[#allocation2 + $0x38] sm:$0xff] %v1132
        $region84: #{tpu_custom_call.1} parent=51 // pred_fallthru
          _
        %p1141 = scmp.eq.s32.totalorder %s26, 2
        // Predicated region
        $region85: #{tpu_custom_call.1} parent=51 // pred_check
          %p1142 = pneg %p1141
        $region86: #{tpu_custom_call.1} parent=51 // pred_check_branch
          %1144 = sbr.rel (%p1142) target = $region88
        $region87: #{tpu_custom_call.1} parent=51 // pred_region
          %1145 = vst [vmem:[#allocation13] sm:$0xff] %v1105
          %1146 = vst [vmem:[#allocation13 + $0x8] sm:$0xff] %v1106
          %1147 = vst [vmem:[#allocation13 + $0x10] sm:$0xff] %v1107
          %1148 = vst [vmem:[#allocation13 + $0x18] sm:$0xff] %v1108
          %1149 = vst [vmem:[#allocation13 + $0x20] sm:$0xff] %v1109
          %1150 = vst [vmem:[#allocation13 + $0x28] sm:$0xff] %v1110
          %1151 = vst [vmem:[#allocation13 + $0x30] sm:$0xff] %v1111
          %1152 = vst [vmem:[#allocation13 + $0x38] sm:$0xff] %v1112
          %1153 = vst [vmem:[#allocation13 + $0x40] sm:$0xff] %v1113
          %1154 = vst [vmem:[#allocation13 + $0x48] sm:$0xff] %v1114
          %1155 = vst [vmem:[#allocation13 + $0x50] sm:$0xff] %v1115
          %1156 = vst [vmem:[#allocation13 + $0x58] sm:$0xff] %v1116
          %1157 = vst [vmem:[#allocation13 + $0x60] sm:$0xff] %v1117
          %1158 = vst [vmem:[#allocation13 + $0x68] sm:$0xff] %v1118
          %1159 = vst [vmem:[#allocation13 + $0x70] sm:$0xff] %v1119
          %1160 = vst [vmem:[#allocation13 + $0x78] sm:$0xff] %v1120
          %v1161 = vpack.c.bf16 %v1106, %v1105
          %v1162 = vpack.c.bf16 %v1108, %v1107
          %v1163 = vpack.c.bf16 %v1110, %v1109
          %v1164 = vpack.c.bf16 %v1112, %v1111
          %v1165 = vpack.c.bf16 %v1114, %v1113
          %v1166 = vpack.c.bf16 %v1116, %v1115
          %v1167 = vpack.c.bf16 %v1118, %v1117
          %v1168 = vpack.c.bf16 %v1120, %v1119
          %v1169 = vld [vmem:[#allocation10] sm:$0xf]
          %v1170 = vld [vmem:[#allocation10 + $0x4] sm:$0xf]
          %v1171 = vld [vmem:[#allocation10 + $0x8] sm:$0xf]
          %v1172 = vld [vmem:[#allocation10 + $0xc] sm:$0xf]
          %v1173 = vld [vmem:[#allocation10 + $0x10] sm:$0xf]
          %v1174 = vld [vmem:[#allocation10 + $0x14] sm:$0xf]
          %v1175 = vld [vmem:[#allocation10 + $0x18] sm:$0xf]
          %v1176 = vld [vmem:[#allocation10 + $0x1c] sm:$0xf]
          %v1177 = vld [vmem:[#allocation10 + $0x20] sm:$0xf]
          %v1178 = vld [vmem:[#allocation10 + $0x24] sm:$0xf]
          %v1179 = vld [vmem:[#allocation10 + $0x28] sm:$0xf]
          %v1180 = vld [vmem:[#allocation10 + $0x2c] sm:$0xf]
          %v1181 = vld [vmem:[#allocation10 + $0x30] sm:$0xf]
          %v1182 = vld [vmem:[#allocation10 + $0x34] sm:$0xf]
          %v1183 = vld [vmem:[#allocation10 + $0x38] sm:$0xf]
          %v1184 = vld [vmem:[#allocation10 + $0x3c] sm:$0xf]
          %v1185 = vld [vmem:[%s5] sm:$0x1]
          %v1187 = vlaneseq
          %v1188 = vshrl.u32 %v1187, 7
          %v1189 = vsub.s32 0, %v1188
          %v1190 = vrot.slane %v1185, %v1189
          %v1208 = vunpack.c.l.b16 %v1169
          %v1209 = vunpack.c.l.b16 %v1170
          %v1210 = vunpack.c.l.b16 %v1171
          %v1211 = vunpack.c.l.b16 %v1172
          %v1212 = vunpack.c.l.b16 %v1173
          %v1213 = vunpack.c.l.b16 %v1174
          %v1214 = vunpack.c.l.b16 %v1175
          %v1215 = vunpack.c.l.b16 %v1176
          %v1216 = vunpack.c.l.b16 %v1177
          %v1217 = vunpack.c.l.b16 %v1178
          %v1218 = vunpack.c.l.b16 %v1179
          %v1219 = vunpack.c.l.b16 %v1180
          %v1220 = vunpack.c.l.b16 %v1181
          %v1221 = vunpack.c.l.b16 %v1182
          %v1222 = vunpack.c.l.b16 %v1183
          %v1223 = vunpack.c.l.b16 %v1184
          %v1224 = vpack.c.b16 %v1209, %v1208
          %v1225 = vpack.c.b16 %v1211, %v1210
          %v1226 = vpack.c.b16 %v1213, %v1212
          %v1227 = vpack.c.b16 %v1215, %v1214
          %v1228 = vpack.c.b16 %v1217, %v1216
          %v1229 = vpack.c.b16 %v1219, %v1218
          %v1230 = vpack.c.b16 %v1221, %v1220
          %v1231 = vpack.c.b16 %v1223, %v1222
          %1240 = vmatprep.subr.bf16.mxu0 0
          %1241 = vmatpush1.bf16.msra.mxu0 %v1224
          %1242 = vmatprep.subr.bf16.mxu0 0
          %1243 = vmatpush1.bf16.msra.mxu0 %v1225
          %1244 = vmatprep.subr.bf16.mxu0 0
          %1245 = vmatpush1.bf16.msra.mxu0 %v1226
          %1246 = vmatprep.subr.bf16.mxu0 0
          %1247 = vmatpush1.bf16.msra.mxu0 %v1227
          %1248 = vmatprep.subr.bf16.mxu0 0
          %1249 = vmatpush1.bf16.msra.mxu0 %v1228
          %1250 = vmatprep.subr.bf16.mxu0 0
          %1251 = vmatpush1.bf16.msra.mxu0 %v1229
          %1252 = vmatprep.subr.bf16.mxu0 0
          %1253 = vmatpush1.bf16.msra.mxu0 %v1230
          %1254 = vmatprep.subr.bf16.mxu0 0
          %1255 = vmatpush1.bf16.msra.mxu0 %v1231
          %1256 = vmatprep.subr.bf16.mxu0 0
          %1257 = vmatpush1.bf16.msra.mxu0 0
          %1258 = vmatprep.subr.bf16.mxu0 0
          %1259 = vmatpush1.bf16.msra.mxu0 0
          %1260 = vmatprep.subr.bf16.mxu0 0
          %1261 = vmatpush1.bf16.msra.mxu0 0
          %1262 = vmatprep.subr.bf16.mxu0 0
          %1263 = vmatpush1.bf16.msra.mxu0 0
          %1264 = vmatprep.subr.bf16.mxu0 0
          %1265 = vmatpush1.bf16.msra.mxu0 0
          %1266 = vmatprep.subr.bf16.mxu0 0
          %1267 = vmatpush1.bf16.msra.mxu0 0
          %1268 = vmatprep.subr.bf16.mxu0 0
          %1269 = vmatpush1.bf16.msra.mxu0 0
          %1270 = vmatprep.subr.bf16.mxu0 0
          %1271 = vmatpush1.bf16.msra.mxu0 0
          %1272 = vmatprep.mubr.bf16.mxu0 0
          %1273 = vmatmul.mubr.bf16.gmra.mrb[0].mxu0 %v1161
          %v1274 = vpop.f32.mrb[0].mxu0
          %v1275 = vadd.f32 %v1190, %v1274
          %v1276 = vpop.f32.mrb[0].mxu0
          %v1277 = vpop.f32.mrb[0].mxu0
          %v1278 = vadd.f32 %v1190, %v1277
          %v1279 = vpop.f32.mrb[0].mxu0
          %1280 = vmatprep.mubr.bf16.mxu0 0
          %1281 = vmatmul.mubr.bf16.gmra.mrb[0].mxu0 %v1162
          %v1282 = vpop.f32.mrb[0].mxu0
          %v1283 = vadd.f32 %v1190, %v1282
          %v1284 = vpop.f32.mrb[0].mxu0
          %v1285 = vpop.f32.mrb[0].mxu0
          %v1286 = vadd.f32 %v1190, %v1285
          %v1287 = vpop.f32.mrb[0].mxu0
          %1288 = vmatprep.mubr.bf16.mxu0 0
          %1289 = vmatmul.mubr.bf16.gmra.mrb[0].mxu0 %v1163
          %v1290 = vpop.f32.mrb[0].mxu0
          %v1291 = vadd.f32 %v1190, %v1290
          %v1292 = vpop.f32.mrb[0].mxu0
          %v1293 = vpop.f32.mrb[0].mxu0
          %v1294 = vadd.f32 %v1190, %v1293
          %v1295 = vpop.f32.mrb[0].mxu0
          %1296 = vmatprep.mubr.bf16.mxu0 0
          %1297 = vmatmul.mubr.bf16.gmra.mrb[0].mxu0 %v1164
          %v1298 = vpop.f32.mrb[0].mxu0
          %v1299 = vadd.f32 %v1190, %v1298
          %v1300 = vpop.f32.mrb[0].mxu0
          %v1301 = vpop.f32.mrb[0].mxu0
          %v1302 = vadd.f32 %v1190, %v1301
          %v1303 = vpop.f32.mrb[0].mxu0
          %1304 = vmatprep.mubr.bf16.mxu0 0
          %1305 = vmatmul.mubr.bf16.gmra.mrb[0].mxu0 %v1165
          %v1306 = vpop.f32.mrb[0].mxu0
          %v1307 = vadd.f32 %v1190, %v1306
          %v1308 = vpop.f32.mrb[0].mxu0
          %v1309 = vpop.f32.mrb[0].mxu0
          %v1310 = vadd.f32 %v1190, %v1309
          %v1311 = vpop.f32.mrb[0].mxu0
          %1312 = vmatprep.mubr.bf16.mxu0 0
          %1313 = vmatmul.mubr.bf16.gmra.mrb[0].mxu0 %v1166
          %v1314 = vpop.f32.mrb[0].mxu0
          %v1315 = vadd.f32 %v1190, %v1314
          %v1316 = vpop.f32.mrb[0].mxu0
          %v1317 = vpop.f32.mrb[0].mxu0
          %v1318 = vadd.f32 %v1190, %v1317
          %v1319 = vpop.f32.mrb[0].mxu0
          %1320 = vmatprep.mubr.bf16.mxu0 0
          %1321 = vmatmul.mubr.bf16.gmra.mrb[0].mxu0 %v1167
          %v1322 = vpop.f32.mrb[0].mxu0
          %v1323 = vadd.f32 %v1190, %v1322
          %v1324 = vpop.f32.mrb[0].mxu0
          %v1325 = vpop.f32.mrb[0].mxu0
          %v1326 = vadd.f32 %v1190, %v1325
          %v1327 = vpop.f32.mrb[0].mxu0
          %1328 = vmatprep.mubr.bf16.mxu0 0
          %1329 = vmatmul.mubr.bf16.gmra.mrb[0].mxu0 %v1168
          %v1330 = vpop.f32.mrb[0].mxu0
          %v1331 = vadd.f32 %v1190, %v1330
          %v1332 = vpop.f32.mrb[0].mxu0
          %v1333 = vpop.f32.mrb[0].mxu0
          %v1334 = vadd.f32 %v1190, %v1333
          %v1335 = vpop.f32.mrb[0].mxu0
          %1336 = vdwg.mxu0
          %v1337 = vmax.f32 %v1275, 0.0
          %v1338 = vmax.f32 %v1278, 0.0
          %v1339 = vmax.f32 %v1283, 0.0
          %v1340 = vmax.f32 %v1286, 0.0
          %v1341 = vmax.f32 %v1291, 0.0
          %v1342 = vmax.f32 %v1294, 0.0
          %v1343 = vmax.f32 %v1299, 0.0
          %v1344 = vmax.f32 %v1302, 0.0
          %v1345 = vmax.f32 %v1307, 0.0
          %v1346 = vmax.f32 %v1310, 0.0
          %v1347 = vmax.f32 %v1315, 0.0
          %v1348 = vmax.f32 %v1318, 0.0
          %v1349 = vmax.f32 %v1323, 0.0
          %v1350 = vmax.f32 %v1326, 0.0
          %v1351 = vmax.f32 %v1331, 0.0
          %v1352 = vmax.f32 %v1334, 0.0
          %v1353 = vpack.c.bf16 %v1338, %v1337
          %v1354 = vpack.c.bf16 %v1340, %v1339
          %v1355 = vpack.c.bf16 %v1342, %v1341
          %v1356 = vpack.c.bf16 %v1344, %v1343
          %v1357 = vpack.c.bf16 %v1346, %v1345
          %v1358 = vpack.c.bf16 %v1348, %v1347
          %v1359 = vpack.c.bf16 %v1350, %v1349
          %v1360 = vpack.c.bf16 %v1352, %v1351
          %v1361 = vld [vmem:[#allocation11] sm:$0xf]
          %v1362 = vld [vmem:[#allocation11 + $0x4] sm:$0xf]
          %v1363 = vld [vmem:[#allocation11 + $0x8] sm:$0xf]
          %v1364 = vld [vmem:[#allocation11 + $0xc] sm:$0xf]
          %v1365 = vld [vmem:[#allocation11 + $0x10] sm:$0xf]
          %v1366 = vld [vmem:[#allocation11 + $0x14] sm:$0xf]
          %v1367 = vld [vmem:[#allocation11 + $0x18] sm:$0xf]
          %v1368 = vld [vmem:[#allocation11 + $0x1c] sm:$0xf]
          %v1369 = vld [vmem:[#allocation11 + $0x20] sm:$0xf]
          %v1370 = vld [vmem:[#allocation11 + $0x24] sm:$0xf]
          %v1371 = vld [vmem:[#allocation11 + $0x28] sm:$0xf]
          %v1372 = vld [vmem:[#allocation11 + $0x2c] sm:$0xf]
          %v1373 = vld [vmem:[#allocation11 + $0x30] sm:$0xf]
          %v1374 = vld [vmem:[#allocation11 + $0x34] sm:$0xf]
          %v1375 = vld [vmem:[#allocation11 + $0x38] sm:$0xf]
          %v1376 = vld [vmem:[#allocation11 + $0x3c] sm:$0xf]
          %v1377 = vld [vmem:[%s7] sm:$0x1]
          %v1379 = vlaneseq
          %v1380 = vshrl.u32 %v1379, 7
          %v1381 = vsub.s32 0, %v1380
          %v1382 = vrot.slane %v1377, %v1381
          %v1400 = vunpack.c.l.b16 %v1361
          %v1401 = vunpack.c.l.b16 %v1362
          %v1402 = vunpack.c.l.b16 %v1363
          %v1403 = vunpack.c.l.b16 %v1364
          %v1404 = vunpack.c.l.b16 %v1365
          %v1405 = vunpack.c.l.b16 %v1366
          %v1406 = vunpack.c.l.b16 %v1367
          %v1407 = vunpack.c.l.b16 %v1368
          %v1408 = vunpack.c.l.b16 %v1369
          %v1409 = vunpack.c.l.b16 %v1370
          %v1410 = vunpack.c.l.b16 %v1371
          %v1411 = vunpack.c.l.b16 %v1372
          %v1412 = vunpack.c.l.b16 %v1373
          %v1413 = vunpack.c.l.b16 %v1374
          %v1414 = vunpack.c.l.b16 %v1375
          %v1415 = vunpack.c.l.b16 %v1376
          %v1416 = vpack.c.b16 %v1401, %v1400
          %v1417 = vpack.c.b16 %v1403, %v1402
          %v1418 = vpack.c.b16 %v1405, %v1404
          %v1419 = vpack.c.b16 %v1407, %v1406
          %v1420 = vpack.c.b16 %v1409, %v1408
          %v1421 = vpack.c.b16 %v1411, %v1410
          %v1422 = vpack.c.b16 %v1413, %v1412
          %v1423 = vpack.c.b16 %v1415, %v1414
          %1432 = vmatprep.subr.bf16.mxu0 0
          %1433 = vmatpush1.bf16.msra.mxu0 %v1416
          %1434 = vmatprep.subr.bf16.mxu0 0
          %1435 = vmatpush1.bf16.msra.mxu0 %v1417
          %1436 = vmatprep.subr.bf16.mxu0 0
          %1437 = vmatpush1.bf16.msra.mxu0 %v1418
          %1438 = vmatprep.subr.bf16.mxu0 0
          %1439 = vmatpush1.bf16.msra.mxu0 %v1419
          %1440 = vmatprep.subr.bf16.mxu0 0
          %1441 = vmatpush1.bf16.msra.mxu0 %v1420
          %1442 = vmatprep.subr.bf16.mxu0 0
          %1443 = vmatpush1.bf16.msra.mxu0 %v1421
          %1444 = vmatprep.subr.bf16.mxu0 0
          %1445 = vmatpush1.bf16.msra.mxu0 %v1422
          %1446 = vmatprep.subr.bf16.mxu0 0
          %1447 = vmatpush1.bf16.msra.mxu0 %v1423
          %1448 = vmatprep.subr.bf16.mxu0 0
          %1449 = vmatpush1.bf16.msra.mxu0 0
          %1450 = vmatprep.subr.bf16.mxu0 0
          %1451 = vmatpush1.bf16.msra.mxu0 0
          %1452 = vmatprep.subr.bf16.mxu0 0
          %1453 = vmatpush1.bf16.msra.mxu0 0
          %1454 = vmatprep.subr.bf16.mxu0 0
          %1455 = vmatpush1.bf16.msra.mxu0 0
          %1456 = vmatprep.subr.bf16.mxu0 0
          %1457 = vmatpush1.bf16.msra.mxu0 0
          %1458 = vmatprep.subr.bf16.mxu0 0
          %1459 = vmatpush1.bf16.msra.mxu0 0
          %1460 = vmatprep.subr.bf16.mxu0 0
          %1461 = vmatpush1.bf16.msra.mxu0 0
          %1462 = vmatprep.subr.bf16.mxu0 0
          %1463 = vmatpush1.bf16.msra.mxu0 0
          %1464 = vmatprep.mubr.bf16.mxu0 0
          %1465 = vmatmul.mubr.bf16.gmra.mrb[0].mxu0 %v1353
          %v1466 = vpop.f32.mrb[0].mxu0
          %v1467 = vadd.f32 %v1382, %v1466
          %v1468 = vpop.f32.mrb[0].mxu0
          %v1469 = vpop.f32.mrb[0].mxu0
          %v1470 = vadd.f32 %v1382, %v1469
          %v1471 = vpop.f32.mrb[0].mxu0
          %1472 = vmatprep.mubr.bf16.mxu0 0
          %1473 = vmatmul.mubr.bf16.gmra.mrb[0].mxu0 %v1354
          %v1474 = vpop.f32.mrb[0].mxu0
          %v1475 = vadd.f32 %v1382, %v1474
          %v1476 = vpop.f32.mrb[0].mxu0
          %v1477 = vpop.f32.mrb[0].mxu0
          %v1478 = vadd.f32 %v1382, %v1477
          %v1479 = vpop.f32.mrb[0].mxu0
          %1480 = vmatprep.mubr.bf16.mxu0 0
          %1481 = vmatmul.mubr.bf16.gmra.mrb[0].mxu0 %v1355
          %v1482 = vpop.f32.mrb[0].mxu0
          %v1483 = vadd.f32 %v1382, %v1482
          %v1484 = vpop.f32.mrb[0].mxu0
          %v1485 = vpop.f32.mrb[0].mxu0
          %v1486 = vadd.f32 %v1382, %v1485
          %v1487 = vpop.f32.mrb[0].mxu0
          %1488 = vmatprep.mubr.bf16.mxu0 0
          %1489 = vmatmul.mubr.bf16.gmra.mrb[0].mxu0 %v1356
          %v1490 = vpop.f32.mrb[0].mxu0
          %v1491 = vadd.f32 %v1382, %v1490
          %v1492 = vpop.f32.mrb[0].mxu0
          %v1493 = vpop.f32.mrb[0].mxu0
          %v1494 = vadd.f32 %v1382, %v1493
          %v1495 = vpop.f32.mrb[0].mxu0
          %1496 = vmatprep.mubr.bf16.mxu0 0
          %1497 = vmatmul.mubr.bf16.gmra.mrb[0].mxu0 %v1357
          %v1498 = vpop.f32.mrb[0].mxu0
          %v1499 = vadd.f32 %v1382, %v1498
          %v1500 = vpop.f32.mrb[0].mxu0
          %v1501 = vpop.f32.mrb[0].mxu0
          %v1502 = vadd.f32 %v1382, %v1501
          %v1503 = vpop.f32.mrb[0].mxu0
          %1504 = vmatprep.mubr.bf16.mxu0 0
          %1505 = vmatmul.mubr.bf16.gmra.mrb[0].mxu0 %v1358
          %v1506 = vpop.f32.mrb[0].mxu0
          %v1507 = vadd.f32 %v1382, %v1506
          %v1508 = vpop.f32.mrb[0].mxu0
          %v1509 = vpop.f32.mrb[0].mxu0
          %v1510 = vadd.f32 %v1382, %v1509
          %v1511 = vpop.f32.mrb[0].mxu0
          %1512 = vmatprep.mubr.bf16.mxu0 0
          %1513 = vmatmul.mubr.bf16.gmra.mrb[0].mxu0 %v1359
          %v1514 = vpop.f32.mrb[0].mxu0
          %v1515 = vadd.f32 %v1382, %v1514
          %v1516 = vpop.f32.mrb[0].mxu0
          %v1517 = vpop.f32.mrb[0].mxu0
          %v1518 = vadd.f32 %v1382, %v1517
          %v1519 = vpop.f32.mrb[0].mxu0
          %1520 = vmatprep.mubr.bf16.mxu0 0
          %1521 = vmatmul.mubr.bf16.gmra.mrb[0].mxu0 %v1360
          %v1522 = vpop.f32.mrb[0].mxu0
          %v1523 = vadd.f32 %v1382, %v1522
          %v1524 = vpop.f32.mrb[0].mxu0
          %v1525 = vpop.f32.mrb[0].mxu0
          %v1526 = vadd.f32 %v1382, %v1525
          %v1527 = vpop.f32.mrb[0].mxu0
          %1528 = vdwg.mxu0
          %1529 = vst [vmem:[#allocation14] sm:$0xff] %v1467
          %1530 = vst [vmem:[#allocation14 + $0x8] sm:$0xff] %v1470
          %1531 = vst [vmem:[#allocation14 + $0x10] sm:$0xff] %v1475
          %1532 = vst [vmem:[#allocation14 + $0x18] sm:$0xff] %v1478
          %1533 = vst [vmem:[#allocation14 + $0x20] sm:$0xff] %v1483
          %1534 = vst [vmem:[#allocation14 + $0x28] sm:$0xff] %v1486
          %1535 = vst [vmem:[#allocation14 + $0x30] sm:$0xff] %v1491
          %1536 = vst [vmem:[#allocation14 + $0x38] sm:$0xff] %v1494
          %1537 = vst [vmem:[#allocation14 + $0x40] sm:$0xff] %v1499
          %1538 = vst [vmem:[#allocation14 + $0x48] sm:$0xff] %v1502
          %1539 = vst [vmem:[#allocation14 + $0x50] sm:$0xff] %v1507
          %1540 = vst [vmem:[#allocation14 + $0x58] sm:$0xff] %v1510
          %1541 = vst [vmem:[#allocation14 + $0x60] sm:$0xff] %v1515
          %1542 = vst [vmem:[#allocation14 + $0x68] sm:$0xff] %v1518
          %1543 = vst [vmem:[#allocation14 + $0x70] sm:$0xff] %v1523
          %1544 = vst [vmem:[#allocation14 + $0x78] sm:$0xff] %v1526
        $region88: #{tpu_custom_call.1} parent=51 // pred_fallthru
          _
        // Predicated region
        $region89: #{tpu_custom_call.1} parent=51 // pred_check
          %p1545 = pneg %p217
        $region90: #{tpu_custom_call.1} parent=51 // pred_check_branch
          %1547 = sbr.rel (%p1545) target = $region92
        $region91: #{tpu_custom_call.1} parent=51 // pred_region
          %s1549 = ssub.s32 2048, 2048
          %1550 = vsyncadd [#allocation5], %s1549
          %s1551 = sshll.u32 [#allocation13], 4
          %s1552 = int_to_ptr.vmem [resolvable:$true] %s1551
          %1557 = dma.vmem_to_hbm [thread:$0]  %s1552, 2048, %s8, [#allocation5], 128, 128, 8
        $region92: #{tpu_custom_call.1} parent=51 // pred_fallthru
          _
        // Predicated region
        $region93: #{tpu_custom_call.1} parent=51 // pred_check
          %p1558 = pneg %p238
        $region94: #{tpu_custom_call.1} parent=51 // pred_check_branch
          %1560 = sbr.rel (%p1558) target = $region96
        $region95: #{tpu_custom_call.1} parent=51 // pred_region
          %s1562 = ssub.s32 2048, 2048
          %1563 = vsyncadd [#allocation15], %s1562
          %s1564 = sshll.u32 [#allocation14], 4
          %s1565 = int_to_ptr.vmem [resolvable:$true] %s1564
          %1570 = dma.vmem_to_hbm [thread:$0]  %s1565, 2048, %s9, [#allocation15], 128, 128, 8
        $region96: #{tpu_custom_call.1} parent=51 // pred_fallthru
          _
        // Predicated region
        $region97: #{tpu_custom_call.1} parent=51 // pred_check
          %p1571 = pneg %p217
        $region98: #{tpu_custom_call.1} parent=51 // pred_check_branch
          %1573 = sbr.rel (%p1571) target = $region100
        $region99: #{tpu_custom_call.1} parent=51 // pred_region
          %1574 = dma.done [#allocation5], 2048
        $region100: #{tpu_custom_call.1} parent=51 // pred_fallthru
          _
        // Predicated region
        $region101: #{tpu_custom_call.1} parent=51 // pred_check
          %p1575 = pneg %p238
        $region102: #{tpu_custom_call.1} parent=51 // pred_check_branch
          %1577 = sbr.rel (%p1575) target = $region104
        $region103: #{tpu_custom_call.1} parent=51 // pred_region
          %1578 = dma.done [#allocation15], 2048
        $region104: #{tpu_custom_call.1} parent=51 // pred_fallthru
          _
      $region52: #{tpu_custom_call.1} parent=5 // pred_fallthru
        _
      %p1579 = scmp.le.s32.totalorder 2, %s21
      // Predicated region
      $region105: #{tpu_custom_call.1} parent=5 // pred_check
        %p1580 = pneg %p1579
      $region106: #{tpu_custom_call.1} parent=5 // pred_check_branch
        %1582 = sbr.rel (%p1580) target = $region108
      $region107: #{tpu_custom_call.1} parent=5 // pred_region
        %s1583 = ssub.s32 %s21, 2
      $region108: #{tpu_custom_call.1} parent=5 // pred_fallthru
        _
    $region6: #{tpu_custom_call.1} parent=1 // loop_footer
      %s25 = sadd.s32 1, %s21
    $region7: #{tpu_custom_call.1} parent=1 // loop_footer_branch
      %20 = sbr.rel target = $region3
    $region8: #{tpu_custom_call.1} parent=1 // loop_exit
      _
    %1584 = vsyncpa [#allocation4], 1
    %s1585 = scalar_lea.sflag [#allocation4], 1
    %1586 = vsyncpa %s1585, 1
    %1587 = vsyncpa [#allocation7], 1
    %1588 = vsyncpa [#allocation12], 1
    %1589 = vsyncpa [#allocation5], 1
    %s1590 = scalar_lea.sflag [#allocation5], 1
    %1591 = vsyncpa %s1590, 1
    %1592 = vsyncpa [#allocation15], 1

</llo_original>
